<compile_context>
chip_gen: v6e
topology: v6e:2x2x1
jax: 0.10.0
libtpu: 0.0.40
codegen_flags: <defaults>
</compile_context>

<pallas_src>
import jax
import jax.numpy as jnp
from jax.experimental import pallas as pl
from jax.experimental.pallas import tpu as pltpu

# SELU constants (match torch.nn.functional.selu)
_SELU_ALPHA = 1.6732632423543772848170429916717
_SELU_SCALE = 1.0507009873554804934193349852946


def _selu(x):
    # exp() maps to the EUP; min(x, 0) keeps the discarded branch finite.
    neg = _SELU_ALPHA * (jnp.exp(jnp.minimum(x, 0.0)) - 1.0)
    return _SELU_SCALE * jnp.where(x > 0, x, neg)


def _round_up(n, m):
    return ((n + m - 1) // m) * m


def _vmem_cap_bytes():
    """~88% of this chip's physical VMEM (conservative v7x default on failure)."""
    try:
        cap = int(pltpu.get_tpu_info().vmem_capacity_bytes)
    except Exception:
        cap = 64 << 20
    return int(cap * 0.88)


def _res_snn_kernel(x_ref,
                    w1_ref, b1_ref,
                    w2_ref, b2_ref,
                    w3_ref, b3_ref,
                    w4_ref, b4_ref,
                    w5_ref, b5_ref,
                    w6_ref, b6_ref,
                    out_ref):
    """One batch tile of the full forward pass; weights are VMEM-resident."""

    def linear(x, w_ref, b_ref):
        # MXU matmul in the weight storage dtype (bf16 fast path), f32 accum;
        # bias add stays in f32.
        y = jnp.dot(x.astype(w_ref.dtype), w_ref[...],
                    preferred_element_type=jnp.float32)
        return y + b_ref[...]

    x0 = x_ref[...]                                  # (TB, F_pad), compute dtype
    x1 = _selu(linear(x0, w1_ref, b1_ref))           # f32 from here on
    x2 = _selu(linear(x1, w2_ref, b2_ref)) + x1
    x3 = _selu(linear(x2, w3_ref, b3_ref)) + x2
    x4 = _selu(linear(x3, w4_ref, b4_ref)) + x3
    x5 = _selu(linear(x4, w5_ref, b5_ref)) + x4
    out_ref[...] = linear(x5, w6_ref, b6_ref).astype(out_ref.dtype)


def prepare_params(params, *, compute_dtype=jnp.bfloat16):
    """Pad + cast the 6 (W, b) pairs once; reuse across forward calls.

    params: list of 6 (W, b) with W shaped (in, out) (PyTorch nn.Linear stores
    (out, in); pre-transpose).  Zero-padded lanes stay exactly 0 through
    SELU + residuals, so results slice back losslessly.
    """
    n_feature = params[0][0].shape[0]
    n_hidden = params[0][0].shape[1]
    n_output = params[-1][0].shape[1]

    f_pad = _round_up(max(n_feature, 1), 128)
    h_pad = _round_up(max(n_hidden, 1), 128)
    o_pad = _round_up(max(n_output, 1), 128)
    in_dims = [f_pad] + [h_pad] * 5
    out_dims = [h_pad] * 5 + [o_pad]

    flat = []
    for (w, b), di, do in zip(params, in_dims, out_dims):
        w = jnp.asarray(w)
        b = jnp.asarray(b).reshape(1, -1)
        wp = jnp.zeros((di, do), compute_dtype)
        wp = wp.at[:w.shape[0], :w.shape[1]].set(w.astype(compute_dtype))
        bp = jnp.zeros((1, do), jnp.float32)
        bp = bp.at[:, :b.shape[1]].set(b.astype(jnp.float32))
        flat.append(wp)
        flat.append(bp)

    return dict(flat=flat, in_dims=in_dims, out_dims=out_dims,
                n_feature=n_feature, n_output=n_output,
                f_pad=f_pad, h_pad=h_pad, o_pad=o_pad,
                compute_dtype=jnp.dtype(compute_dtype))


def res_snn_forward(x, prepared, *, block_batch=None):
    """Forward pass of ResSNN on pre-padded params from prepare_params()."""
    batch, n_feature = x.shape
    assert n_feature == prepared["n_feature"], "feature dim mismatch"
    f_pad, h_pad, o_pad = prepared["f_pad"], prepared["h_pad"], prepared["o_pad"]
    cdt = prepared["compute_dtype"]
    in_dims, out_dims = prepared["in_dims"], prepared["out_dims"]

    # Batch tile: >=2 grid steps once batch >= 16 (megacore split on v7x),
    # tiles up to 1024 rows to amortize per-step overhead on v5e/v6e.
    if block_batch is None:
        block_batch = min(1024, _round_up(max(pl.cdiv(batch, 2), 8), 8))
    tb = _round_up(block_batch, 8)
    batch_pad = _round_up(batch, tb)
    grid = (batch_pad // tb,)

    # Stream x in the compute dtype; skip the pad/cast copy entirely when the
    # input is already lane-dense and tile-aligned.
    if batch_pad == batch and f_pad == n_feature and x.dtype == cdt:
        xp = x
    else:
        xp = jnp.zeros((batch_pad, f_pad), cdt)
        xp = xp.at[:batch, :n_feature].set(x.astype(cdt))

    w_itemsize = cdt.itemsize
    weight_bytes = sum(di * do * w_itemsize + do * 4
                       for di, do in zip(in_dims, out_dims))
    act_tile_bytes = tb * f_pad * w_itemsize + tb * o_pad * 4   # streamed tiles
    interm_bytes = 3 * tb * h_pad * 4                           # ~3 live acts

    flops = 2 * batch_pad * (f_pad * h_pad + 4 * h_pad * h_pad + h_pad * o_pad)
    transcendentals = 5 * batch_pad * h_pad
    bytes_accessed = int(weight_bytes + xp.size * w_itemsize
                         + batch_pad * o_pad * 4)

    def build(weight_buffers):
        x_spec = pl.BlockSpec((tb, f_pad), lambda i: (i, 0))
        out_spec = pl.BlockSpec((tb, o_pad), lambda i: (i, 0))
        pin = {} if weight_buffers != 1 else {"pipeline_mode": pl.Buffered(1)}
        wb_specs = []
        for di, do in zip(in_dims, out_dims):
            wb_specs.append(pl.BlockSpec((di, do), lambda i: (0, 0), **pin))
            wb_specs.append(pl.BlockSpec((1, do), lambda i: (0, 0), **pin))

        need = (weight_buffers * weight_bytes + 2 * act_tile_bytes
                + interm_bytes + (8 << 20))
        vmem_limit = int(min(max(need, 16 << 20), _vmem_cap_bytes()))

        return pl.pallas_call(
            _res_snn_kernel,
            out_shape=jax.ShapeDtypeStruct((batch_pad, o_pad), jnp.float32),
            grid=grid,
            in_specs=[x_spec] + wb_specs,
            out_specs=out_spec,
            compiler_params=pltpu.CompilerParams(
                dimension_semantics=("parallel",),
                vmem_limit_bytes=vmem_limit),
            cost_estimate=pl.CostEstimate(
                flops=flops,
                transcendentals=transcendentals,
                bytes_accessed=bytes_accessed),
        )

    flat_args = [xp] + list(prepared["flat"])
    try:
        out_padded = build(1)(*flat_args)
    except Exception:
        # Fallback: jax version without single-buffered pinned blocks.
        out_padded = build(2)(*flat_args)

    return out_padded[:batch, :prepared["n_output"]]


def init_params(key, n_feature, n_hidden, n_output):
    """Deterministic init mirroring nn.Linear's U(-1/sqrt(fan_in), 1/sqrt(fan_in))."""
    dims = [(n_feature, n_hidden),
            (n_hidden, n_hidden),
            (n_hidden, n_hidden),
            (n_hidden, n_hidden),
            (n_hidden, n_hidden),
            (n_hidden, n_output)]
    params = []
    for (fan_in, fan_out) in dims:
        key, kw, kb = jax.random.split(key, 3)
        bound = 1.0 / (fan_in ** 0.5)
        w = jax.random.uniform(kw, (fan_in, fan_out), jnp.float32, -bound, bound)
        b = jax.random.uniform(kb, (fan_out,), jnp.float32, -bound, bound)
        params.append((w, b))
    return params


def _reference_forward(x, params):
    """Pure-JAX f32 reference for correctness checks."""
    def lin(a, wb):
        w, b = wb
        return a @ w + b.reshape(1, -1)
    x1 = _selu(lin(x, params[0]))
    x2 = _selu(lin(x1, params[1])) + x1
    x3 = _selu(lin(x2, params[2])) + x2
    x4 = _selu(lin(x3, params[3])) + x3
    x5 = _selu(lin(x4, params[4])) + x4
    return lin(x5, params[5])


if __name__ == "__main__":
    key = jax.random.PRNGKey(0)
    k_x, k_p = jax.random.split(key)

    batch, n_feature, n_hidden, n_output = 8, 16, 32, 4
    x = jax.random.normal(k_x, (batch, n_feature), jnp.float32)
    params = init_params(k_p, n_feature, n_hidden, n_output)
    ref = _reference_forward(x, params)

    # f32 path, single grid step.
    prep_f32 = prepare_params(params, compute_dtype=jnp.float32)
    out = jax.block_until_ready(res_snn_forward(x, prep_f32))
    assert out.shape == (batch, n_output)
    assert jnp.allclose(out, ref, atol=1e-4, rtol=1e-4), "f32 mismatch vs reference"

    # Multi-step grid path: batch=20 with TB=8 -> 3 grid steps + batch padding.
    x2 = jax.random.normal(jax.random.PRNGKey(1), (20, n_feature), jnp.float32)
    ref2 = _reference_forward(x2, params)
    out2 = jax.block_until_ready(res_snn_forward(x2, prep_f32, block_batch=8))
    assert out2.shape == (20, n_output)
    assert jnp.allclose(out2, ref2, atol=1e-4, rtol=1e-4), "tiled mismatch vs reference"

    # bf16 MXU-feed default path (bf16 streaming, f32 accumulation).
    prep_bf16 = prepare_params(params)           # compute_dtype=bf16 default
    out_bf16 = jax.block_until_ready(res_snn_forward(x, prep_bf16))
    assert out_bf16.shape == (batch, n_output)
    assert jnp.allclose(out_bf16, ref, atol=0.1, rtol=0.1), "bf16 path diverged"

    # Lane-dense, tile-aligned input exercises the zero-copy streaming path
    # (batch=16 -> 2 grid steps, n_feature=128 -> no host-side pad).
    params3 = init_params(jax.random.PRNGKey(2), 128, n_hidden, n_output)
    x3 = jax.random.normal(jax.random.PRNGKey(3), (16, 128), jnp.float32)
    ref3 = _reference_forward(x3, params3)
    prep3 = prepare_params(params3, compute_dtype=jnp.float32)
    out3 = jax.block_until_ready(res_snn_forward(x3, prep3))
    assert out3.shape == (16, n_output)
    assert jnp.allclose(out3, ref3, atol=1e-4, rtol=1e-4), "zero-copy path mismatch"

    print("KERNEL_OK")
</pallas_src>

<mosaic_0001>
module attributes {stable_mosaic.version = 11 : i64} {
  func.func @_res_snn_kernel(%arg0: i32, %arg1: memref<8x128xf32, #tpu.memory_space<vmem>>, %arg2: memref<128x128xf32, #tpu.memory_space<vmem>>, %arg3: memref<1x128xf32, #tpu.memory_space<vmem>>, %arg4: memref<128x128xf32, #tpu.memory_space<vmem>>, %arg5: memref<1x128xf32, #tpu.memory_space<vmem>>, %arg6: memref<128x128xf32, #tpu.memory_space<vmem>>, %arg7: memref<1x128xf32, #tpu.memory_space<vmem>>, %arg8: memref<128x128xf32, #tpu.memory_space<vmem>>, %arg9: memref<1x128xf32, #tpu.memory_space<vmem>>, %arg10: memref<128x128xf32, #tpu.memory_space<vmem>>, %arg11: memref<1x128xf32, #tpu.memory_space<vmem>>, %arg12: memref<128x128xf32, #tpu.memory_space<vmem>>, %arg13: memref<1x128xf32, #tpu.memory_space<vmem>>, %arg14: memref<8x128xf32, #tpu.memory_space<vmem>>) attributes {dimension_semantics = [#tpu.dimension_semantics<parallel>], iteration_bounds = array<i64: 1>, scalar_prefetch = 0 : i64, scratch_operands = 0 : i64, tpu.core_type = #tpu.core_type<tc>, window_params = [{transform_indices = @transform_0, window_bounds = array<i64: 8, 128>}, {pipeline_mode = #tpu.pipeline_mode<synchronous>, transform_indices = @transform_1, window_bounds = array<i64: 128, 128>}, {pipeline_mode = #tpu.pipeline_mode<synchronous>, transform_indices = @transform_2, window_bounds = array<i64: 1, 128>}, {pipeline_mode = #tpu.pipeline_mode<synchronous>, transform_indices = @transform_3, window_bounds = array<i64: 128, 128>}, {pipeline_mode = #tpu.pipeline_mode<synchronous>, transform_indices = @transform_4, window_bounds = array<i64: 1, 128>}, {pipeline_mode = #tpu.pipeline_mode<synchronous>, transform_indices = @transform_5, window_bounds = array<i64: 128, 128>}, {pipeline_mode = #tpu.pipeline_mode<synchronous>, transform_indices = @transform_6, window_bounds = array<i64: 1, 128>}, {pipeline_mode = #tpu.pipeline_mode<synchronous>, transform_indices = @transform_7, window_bounds = array<i64: 128, 128>}, {pipeline_mode = #tpu.pipeline_mode<synchronous>, transform_indices = @transform_8, window_bounds = array<i64: 1, 128>}, {pipeline_mode = #tpu.pipeline_mode<synchronous>, transform_indices = @transform_9, window_bounds = array<i64: 128, 128>}, {pipeline_mode = #tpu.pipeline_mode<synchronous>, transform_indices = @transform_10, window_bounds = array<i64: 1, 128>}, {pipeline_mode = #tpu.pipeline_mode<synchronous>, transform_indices = @transform_11, window_bounds = array<i64: 128, 128>}, {pipeline_mode = #tpu.pipeline_mode<synchronous>, transform_indices = @transform_12, window_bounds = array<i64: 1, 128>}, {transform_indices = @transform_13, window_bounds = array<i64: 8, 128>}]} {
    %c0 = arith.constant 0 : index
    %c0_0 = arith.constant 0 : index
    %0 = vector.load %arg1[%c0, %c0_0] : memref<8x128xf32, #tpu.memory_space<vmem>>, vector<8x128xf32>
    %c0_1 = arith.constant 0 : index
    %c0_2 = arith.constant 0 : index
    %1 = vector.load %arg2[%c0_1, %c0_2] : memref<128x128xf32, #tpu.memory_space<vmem>>, vector<128x128xf32>
    %cst = arith.constant dense<0.000000e+00> : vector<8x128xf32>
    %2 = tpu.matmul %0, %1, %cst {dimension_numbers = #tpu.dot_dimension_numbers<[1], [0], [0], [1], [0, 0, 1, 1], [], []>} : vector<8x128xf32>, vector<128x128xf32>, vector<8x128xf32> -> vector<8x128xf32>
    %c0_3 = arith.constant 0 : index
    %c0_4 = arith.constant 0 : index
    %3 = vector.load %arg3[%c0_3, %c0_4] : memref<1x128xf32, #tpu.memory_space<vmem>>, vector<1x128xf32>
    %4 = vector.broadcast %3 : vector<1x128xf32> to vector<8x128xf32>
    %5 = arith.addf %2, %4 : vector<8x128xf32>
    %cst_5 = arith.constant 0.000000e+00 : f32
    %6 = vector.broadcast %cst_5 : f32 to vector<8x128xf32>
    %7 = arith.minimumf %5, %6 : vector<8x128xf32>
    %8 = math.exp %7 : vector<8x128xf32>
    %cst_6 = arith.constant 1.000000e+00 : f32
    %9 = vector.broadcast %cst_6 : f32 to vector<8x128xf32>
    %10 = arith.subf %8, %9 : vector<8x128xf32>
    %cst_7 = arith.constant 1.67326319 : f32
    %11 = vector.broadcast %cst_7 : f32 to vector<8x128xf32>
    %12 = arith.mulf %11, %10 : vector<8x128xf32>
    %cst_8 = arith.constant 0.000000e+00 : f32
    %13 = vector.broadcast %cst_8 : f32 to vector<8x128xf32>
    %14 = arith.cmpf ogt, %5, %13 : vector<8x128xf32>
    %15 = arith.select %14, %5, %12 : vector<8x128xi1>, vector<8x128xf32>
    %cst_9 = arith.constant 1.05070102 : f32
    %16 = vector.broadcast %cst_9 : f32 to vector<8x128xf32>
    %17 = arith.mulf %16, %15 : vector<8x128xf32>
    %c0_10 = arith.constant 0 : index
    %c0_11 = arith.constant 0 : index
    %18 = vector.load %arg4[%c0_10, %c0_11] : memref<128x128xf32, #tpu.memory_space<vmem>>, vector<128x128xf32>
    %cst_12 = arith.constant dense<0.000000e+00> : vector<8x128xf32>
    %19 = tpu.matmul %17, %18, %cst_12 {dimension_numbers = #tpu.dot_dimension_numbers<[1], [0], [0], [1], [0, 0, 1, 1], [], []>} : vector<8x128xf32>, vector<128x128xf32>, vector<8x128xf32> -> vector<8x128xf32>
    %c0_13 = arith.constant 0 : index
    %c0_14 = arith.constant 0 : index
    %20 = vector.load %arg5[%c0_13, %c0_14] : memref<1x128xf32, #tpu.memory_space<vmem>>, vector<1x128xf32>
    %21 = vector.broadcast %20 : vector<1x128xf32> to vector<8x128xf32>
    %22 = arith.addf %19, %21 : vector<8x128xf32>
    %cst_15 = arith.constant 0.000000e+00 : f32
    %23 = vector.broadcast %cst_15 : f32 to vector<8x128xf32>
    %24 = arith.minimumf %22, %23 : vector<8x128xf32>
    %25 = math.exp %24 : vector<8x128xf32>
    %cst_16 = arith.constant 1.000000e+00 : f32
    %26 = vector.broadcast %cst_16 : f32 to vector<8x128xf32>
    %27 = arith.subf %25, %26 : vector<8x128xf32>
    %cst_17 = arith.constant 1.67326319 : f32
    %28 = vector.broadcast %cst_17 : f32 to vector<8x128xf32>
    %29 = arith.mulf %28, %27 : vector<8x128xf32>
    %cst_18 = arith.constant 0.000000e+00 : f32
    %30 = vector.broadcast %cst_18 : f32 to vector<8x128xf32>
    %31 = arith.cmpf ogt, %22, %30 : vector<8x128xf32>
    %32 = arith.select %31, %22, %29 : vector<8x128xi1>, vector<8x128xf32>
    %cst_19 = arith.constant 1.05070102 : f32
    %33 = vector.broadcast %cst_19 : f32 to vector<8x128xf32>
    %34 = arith.mulf %33, %32 : vector<8x128xf32>
    %35 = arith.addf %34, %17 : vector<8x128xf32>
    %c0_20 = arith.constant 0 : index
    %c0_21 = arith.constant 0 : index
    %36 = vector.load %arg6[%c0_20, %c0_21] : memref<128x128xf32, #tpu.memory_space<vmem>>, vector<128x128xf32>
    %cst_22 = arith.constant dense<0.000000e+00> : vector<8x128xf32>
    %37 = tpu.matmul %35, %36, %cst_22 {dimension_numbers = #tpu.dot_dimension_numbers<[1], [0], [0], [1], [0, 0, 1, 1], [], []>} : vector<8x128xf32>, vector<128x128xf32>, vector<8x128xf32> -> vector<8x128xf32>
    %c0_23 = arith.constant 0 : index
    %c0_24 = arith.constant 0 : index
    %38 = vector.load %arg7[%c0_23, %c0_24] : memref<1x128xf32, #tpu.memory_space<vmem>>, vector<1x128xf32>
    %39 = vector.broadcast %38 : vector<1x128xf32> to vector<8x128xf32>
    %40 = arith.addf %37, %39 : vector<8x128xf32>
    %cst_25 = arith.constant 0.000000e+00 : f32
    %41 = vector.broadcast %cst_25 : f32 to vector<8x128xf32>
    %42 = arith.minimumf %40, %41 : vector<8x128xf32>
    %43 = math.exp %42 : vector<8x128xf32>
    %cst_26 = arith.constant 1.000000e+00 : f32
    %44 = vector.broadcast %cst_26 : f32 to vector<8x128xf32>
    %45 = arith.subf %43, %44 : vector<8x128xf32>
    %cst_27 = arith.constant 1.67326319 : f32
    %46 = vector.broadcast %cst_27 : f32 to vector<8x128xf32>
    %47 = arith.mulf %46, %45 : vector<8x128xf32>
    %cst_28 = arith.constant 0.000000e+00 : f32
    %48 = vector.broadcast %cst_28 : f32 to vector<8x128xf32>
    %49 = arith.cmpf ogt, %40, %48 : vector<8x128xf32>
    %50 = arith.select %49, %40, %47 : vector<8x128xi1>, vector<8x128xf32>
    %cst_29 = arith.constant 1.05070102 : f32
    %51 = vector.broadcast %cst_29 : f32 to vector<8x128xf32>
    %52 = arith.mulf %51, %50 : vector<8x128xf32>
    %53 = arith.addf %52, %35 : vector<8x128xf32>
    %c0_30 = arith.constant 0 : index
    %c0_31 = arith.constant 0 : index
    %54 = vector.load %arg8[%c0_30, %c0_31] : memref<128x128xf32, #tpu.memory_space<vmem>>, vector<128x128xf32>
    %cst_32 = arith.constant dense<0.000000e+00> : vector<8x128xf32>
    %55 = tpu.matmul %53, %54, %cst_32 {dimension_numbers = #tpu.dot_dimension_numbers<[1], [0], [0], [1], [0, 0, 1, 1], [], []>} : vector<8x128xf32>, vector<128x128xf32>, vector<8x128xf32> -> vector<8x128xf32>
    %c0_33 = arith.constant 0 : index
    %c0_34 = arith.constant 0 : index
    %56 = vector.load %arg9[%c0_33, %c0_34] : memref<1x128xf32, #tpu.memory_space<vmem>>, vector<1x128xf32>
    %57 = vector.broadcast %56 : vector<1x128xf32> to vector<8x128xf32>
    %58 = arith.addf %55, %57 : vector<8x128xf32>
    %cst_35 = arith.constant 0.000000e+00 : f32
    %59 = vector.broadcast %cst_35 : f32 to vector<8x128xf32>
    %60 = arith.minimumf %58, %59 : vector<8x128xf32>
    %61 = math.exp %60 : vector<8x128xf32>
    %cst_36 = arith.constant 1.000000e+00 : f32
    %62 = vector.broadcast %cst_36 : f32 to vector<8x128xf32>
    %63 = arith.subf %61, %62 : vector<8x128xf32>
    %cst_37 = arith.constant 1.67326319 : f32
    %64 = vector.broadcast %cst_37 : f32 to vector<8x128xf32>
    %65 = arith.mulf %64, %63 : vector<8x128xf32>
    %cst_38 = arith.constant 0.000000e+00 : f32
    %66 = vector.broadcast %cst_38 : f32 to vector<8x128xf32>
    %67 = arith.cmpf ogt, %58, %66 : vector<8x128xf32>
    %68 = arith.select %67, %58, %65 : vector<8x128xi1>, vector<8x128xf32>
    %cst_39 = arith.constant 1.05070102 : f32
    %69 = vector.broadcast %cst_39 : f32 to vector<8x128xf32>
    %70 = arith.mulf %69, %68 : vector<8x128xf32>
    %71 = arith.addf %70, %53 : vector<8x128xf32>
    %c0_40 = arith.constant 0 : index
    %c0_41 = arith.constant 0 : index
    %72 = vector.load %arg10[%c0_40, %c0_41] : memref<128x128xf32, #tpu.memory_space<vmem>>, vector<128x128xf32>
    %cst_42 = arith.constant dense<0.000000e+00> : vector<8x128xf32>
    %73 = tpu.matmul %71, %72, %cst_42 {dimension_numbers = #tpu.dot_dimension_numbers<[1], [0], [0], [1], [0, 0, 1, 1], [], []>} : vector<8x128xf32>, vector<128x128xf32>, vector<8x128xf32> -> vector<8x128xf32>
    %c0_43 = arith.constant 0 : index
    %c0_44 = arith.constant 0 : index
    %74 = vector.load %arg11[%c0_43, %c0_44] : memref<1x128xf32, #tpu.memory_space<vmem>>, vector<1x128xf32>
    %75 = vector.broadcast %74 : vector<1x128xf32> to vector<8x128xf32>
    %76 = arith.addf %73, %75 : vector<8x128xf32>
    %cst_45 = arith.constant 0.000000e+00 : f32
    %77 = vector.broadcast %cst_45 : f32 to vector<8x128xf32>
    %78 = arith.minimumf %76, %77 : vector<8x128xf32>
    %79 = math.exp %78 : vector<8x128xf32>
    %cst_46 = arith.constant 1.000000e+00 : f32
    %80 = vector.broadcast %cst_46 : f32 to vector<8x128xf32>
    %81 = arith.subf %79, %80 : vector<8x128xf32>
    %cst_47 = arith.constant 1.67326319 : f32
    %82 = vector.broadcast %cst_47 : f32 to vector<8x128xf32>
    %83 = arith.mulf %82, %81 : vector<8x128xf32>
    %cst_48 = arith.constant 0.000000e+00 : f32
    %84 = vector.broadcast %cst_48 : f32 to vector<8x128xf32>
    %85 = arith.cmpf ogt, %76, %84 : vector<8x128xf32>
    %86 = arith.select %85, %76, %83 : vector<8x128xi1>, vector<8x128xf32>
    %cst_49 = arith.constant 1.05070102 : f32
    %87 = vector.broadcast %cst_49 : f32 to vector<8x128xf32>
    %88 = arith.mulf %87, %86 : vector<8x128xf32>
    %89 = arith.addf %88, %71 : vector<8x128xf32>
    %c0_50 = arith.constant 0 : index
    %c0_51 = arith.constant 0 : index
    %90 = vector.load %arg12[%c0_50, %c0_51] : memref<128x128xf32, #tpu.memory_space<vmem>>, vector<128x128xf32>
    %cst_52 = arith.constant dense<0.000000e+00> : vector<8x128xf32>
    %91 = tpu.matmul %89, %90, %cst_52 {dimension_numbers = #tpu.dot_dimension_numbers<[1], [0], [0], [1], [0, 0, 1, 1], [], []>} : vector<8x128xf32>, vector<128x128xf32>, vector<8x128xf32> -> vector<8x128xf32>
    %c0_53 = arith.constant 0 : index
    %c0_54 = arith.constant 0 : index
    %92 = vector.load %arg13[%c0_53, %c0_54] : memref<1x128xf32, #tpu.memory_space<vmem>>, vector<1x128xf32>
    %93 = vector.broadcast %92 : vector<1x128xf32> to vector<8x128xf32>
    %94 = arith.addf %91, %93 : vector<8x128xf32>
    %c0_55 = arith.constant 0 : index
    %c0_56 = arith.constant 0 : index
    %95 = vector.load %arg14[%c0_55, %c0_56] : memref<8x128xf32, #tpu.memory_space<vmem>>, vector<8x128xf32>
    tpu.vector_store %arg14[%c0_55, %c0_56], %94 {strides = array<i32>} : memref<8x128xf32, #tpu.memory_space<vmem>>, vector<8x128xf32>,
    return
  }
  func.func @transform_0(%arg0: i32) -> (i32, i32) {
    %c0_i32 = arith.constant 0 : i32
    %c0_i32_0 = arith.constant 0 : i32
    return %arg0, %c0_i32 : i32, i32
  }
  func.func @transform_1(%arg0: i32) -> (i32, i32) {
    %c0_i32 = arith.constant 0 : i32
    %c0_i32_0 = arith.constant 0 : i32
    %c0_i32_1 = arith.constant 0 : i32
    return %c0_i32, %c0_i32_0 : i32, i32
  }
  func.func @transform_2(%arg0: i32) -> (i32, i32) {
    %c0_i32 = arith.constant 0 : i32
    %c0_i32_0 = arith.constant 0 : i32
    %c0_i32_1 = arith.constant 0 : i32
    return %c0_i32, %c0_i32_0 : i32, i32
  }
  func.func @transform_3(%arg0: i32) -> (i32, i32) {
    %c0_i32 = arith.constant 0 : i32
    %c0_i32_0 = arith.constant 0 : i32
    %c0_i32_1 = arith.constant 0 : i32
    return %c0_i32, %c0_i32_0 : i32, i32
  }
  func.func @transform_4(%arg0: i32) -> (i32, i32) {
    %c0_i32 = arith.constant 0 : i32
    %c0_i32_0 = arith.constant 0 : i32
    %c0_i32_1 = arith.constant 0 : i32
    return %c0_i32, %c0_i32_0 : i32, i32
  }
  func.func @transform_5(%arg0: i32) -> (i32, i32) {
    %c0_i32 = arith.constant 0 : i32
    %c0_i32_0 = arith.constant 0 : i32
    %c0_i32_1 = arith.constant 0 : i32
    return %c0_i32, %c0_i32_0 : i32, i32
  }
  func.func @transform_6(%arg0: i32) -> (i32, i32) {
    %c0_i32 = arith.constant 0 : i32
    %c0_i32_0 = arith.constant 0 : i32
    %c0_i32_1 = arith.constant 0 : i32
    return %c0_i32, %c0_i32_0 : i32, i32
  }
  func.func @transform_7(%arg0: i32) -> (i32, i32) {
    %c0_i32 = arith.constant 0 : i32
    %c0_i32_0 = arith.constant 0 : i32
    %c0_i32_1 = arith.constant 0 : i32
    return %c0_i32, %c0_i32_0 : i32, i32
  }
  func.func @transform_8(%arg0: i32) -> (i32, i32) {
    %c0_i32 = arith.constant 0 : i32
    %c0_i32_0 = arith.constant 0 : i32
    %c0_i32_1 = arith.constant 0 : i32
    return %c0_i32, %c0_i32_0 : i32, i32
  }
  func.func @transform_9(%arg0: i32) -> (i32, i32) {
    %c0_i32 = arith.constant 0 : i32
    %c0_i32_0 = arith.constant 0 : i32
    %c0_i32_1 = arith.constant 0 : i32
    return %c0_i32, %c0_i32_0 : i32, i32
  }
  func.func @transform_10(%arg0: i32) -> (i32, i32) {
    %c0_i32 = arith.constant 0 : i32
    %c0_i32_0 = arith.constant 0 : i32
    %c0_i32_1 = arith.constant 0 : i32
    return %c0_i32, %c0_i32_0 : i32, i32
  }
  func.func @transform_11(%arg0: i32) -> (i32, i32) {
    %c0_i32 = arith.constant 0 : i32
    %c0_i32_0 = arith.constant 0 : i32
    %c0_i32_1 = arith.constant 0 : i32
    return %c0_i32, %c0_i32_0 : i32, i32
  }
  func.func @transform_12(%arg0: i32) -> (i32, i32) {
    %c0_i32 = arith.constant 0 : i32
    %c0_i32_0 = arith.constant 0 : i32
    %c0_i32_1 = arith.constant 0 : i32
    return %c0_i32, %c0_i32_0 : i32, i32
  }
  func.func @transform_13(%arg0: i32) -> (i32, i32) {
    %c0_i32 = arith.constant 0 : i32
    %c0_i32_0 = arith.constant 0 : i32
    return %arg0, %c0_i32 : i32, i32
  }
}

module attributes {stable_mosaic.version = 11 : i64} {
  func.func @_res_snn_kernel(%arg0: i32, %arg1: memref<8x128xf32, #tpu.memory_space<vmem>>, %arg2: memref<128x128xf32, #tpu.memory_space<vmem>>, %arg3: memref<1x128xf32, #tpu.memory_space<vmem>>, %arg4: memref<128x128xf32, #tpu.memory_space<vmem>>, %arg5: memref<1x128xf32, #tpu.memory_space<vmem>>, %arg6: memref<128x128xf32, #tpu.memory_space<vmem>>, %arg7: memref<1x128xf32, #tpu.memory_space<vmem>>, %arg8: memref<128x128xf32, #tpu.memory_space<vmem>>, %arg9: memref<1x128xf32, #tpu.memory_space<vmem>>, %arg10: memref<128x128xf32, #tpu.memory_space<vmem>>, %arg11: memref<1x128xf32, #tpu.memory_space<vmem>>, %arg12: memref<128x128xf32, #tpu.memory_space<vmem>>, %arg13: memref<1x128xf32, #tpu.memory_space<vmem>>, %arg14: memref<8x128xf32, #tpu.memory_space<vmem>>) attributes {dimension_semantics = [#tpu.dimension_semantics<parallel>], iteration_bounds = array<i64: 1>, scalar_prefetch = 0 : i64, scratch_operands = 0 : i64, tpu.core_type = #tpu.core_type<tc>, window_params = [{transform_indices = @transform_0, window_bounds = array<i64: 8, 128>}, {pipeline_mode = #tpu.pipeline_mode<synchronous>, transform_indices = @transform_1, window_bounds = array<i64: 128, 128>}, {pipeline_mode = #tpu.pipeline_mode<synchronous>, transform_indices = @transform_2, window_bounds = array<i64: 1, 128>}, {pipeline_mode = #tpu.pipeline_mode<synchronous>, transform_indices = @transform_3, window_bounds = array<i64: 128, 128>}, {pipeline_mode = #tpu.pipeline_mode<synchronous>, transform_indices = @transform_4, window_bounds = array<i64: 1, 128>}, {pipeline_mode = #tpu.pipeline_mode<synchronous>, transform_indices = @transform_5, window_bounds = array<i64: 128, 128>}, {pipeline_mode = #tpu.pipeline_mode<synchronous>, transform_indices = @transform_6, window_bounds = array<i64: 1, 128>}, {pipeline_mode = #tpu.pipeline_mode<synchronous>, transform_indices = @transform_7, window_bounds = array<i64: 128, 128>}, {pipeline_mode = #tpu.pipeline_mode<synchronous>, transform_indices = @transform_8, window_bounds = array<i64: 1, 128>}, {pipeline_mode = #tpu.pipeline_mode<synchronous>, transform_indices = @transform_9, window_bounds = array<i64: 128, 128>}, {pipeline_mode = #tpu.pipeline_mode<synchronous>, transform_indices = @transform_10, window_bounds = array<i64: 1, 128>}, {pipeline_mode = #tpu.pipeline_mode<synchronous>, transform_indices = @transform_11, window_bounds = array<i64: 128, 128>}, {pipeline_mode = #tpu.pipeline_mode<synchronous>, transform_indices = @transform_12, window_bounds = array<i64: 1, 128>}, {transform_indices = @transform_13, window_bounds = array<i64: 8, 128>}]} {
    %c0 = arith.constant 0 : index
    %c0_0 = arith.constant 0 : index
    %0 = vector.load %arg1[%c0, %c0_0] : memref<8x128xf32, #tpu.memory_space<vmem>>, vector<8x128xf32>
    %c0_1 = arith.constant 0 : index
    %c0_2 = arith.constant 0 : index
    %1 = vector.load %arg2[%c0_1, %c0_2] : memref<128x128xf32, #tpu.memory_space<vmem>>, vector<128x128xf32>
    %cst = arith.constant dense<0.000000e+00> : vector<8x128xf32>
    %2 = tpu.matmul %0, %1, %cst {dimension_numbers = #tpu.dot_dimension_numbers<[1], [0], [0], [1], [0, 0, 1, 1], [], []>} : vector<8x128xf32>, vector<128x128xf32>, vector<8x128xf32> -> vector<8x128xf32>
    %c0_3 = arith.constant 0 : index
    %c0_4 = arith.constant 0 : index
    %3 = vector.load %arg3[%c0_3, %c0_4] : memref<1x128xf32, #tpu.memory_space<vmem>>, vector<1x128xf32>
    %4 = vector.broadcast %3 : vector<1x128xf32> to vector<8x128xf32>
    %5 = arith.addf %2, %4 : vector<8x128xf32>
    %cst_5 = arith.constant 0.000000e+00 : f32
    %6 = vector.broadcast %cst_5 : f32 to vector<8x128xf32>
    %7 = arith.minimumf %5, %6 : vector<8x128xf32>
    %8 = math.exp %7 : vector<8x128xf32>
    %cst_6 = arith.constant 1.000000e+00 : f32
    %9 = vector.broadcast %cst_6 : f32 to vector<8x128xf32>
    %10 = arith.subf %8, %9 : vector<8x128xf32>
    %cst_7 = arith.constant 1.67326319 : f32
    %11 = vector.broadcast %cst_7 : f32 to vector<8x128xf32>
    %12 = arith.mulf %11, %10 : vector<8x128xf32>
    %cst_8 = arith.constant 0.000000e+00 : f32
    %13 = vector.broadcast %cst_8 : f32 to vector<8x128xf32>
    %14 = arith.cmpf ogt, %5, %13 : vector<8x128xf32>
    %15 = arith.select %14, %5, %12 : vector<8x128xi1>, vector<8x128xf32>
    %cst_9 = arith.constant 1.05070102 : f32
    %16 = vector.broadcast %cst_9 : f32 to vector<8x128xf32>
    %17 = arith.mulf %16, %15 : vector<8x128xf32>
    %c0_10 = arith.constant 0 : index
    %c0_11 = arith.constant 0 : index
    %18 = vector.load %arg4[%c0_10, %c0_11] : memref<128x128xf32, #tpu.memory_space<vmem>>, vector<128x128xf32>
    %cst_12 = arith.constant dense<0.000000e+00> : vector<8x128xf32>
    %19 = tpu.matmul %17, %18, %cst_12 {dimension_numbers = #tpu.dot_dimension_numbers<[1], [0], [0], [1], [0, 0, 1, 1], [], []>} : vector<8x128xf32>, vector<128x128xf32>, vector<8x128xf32> -> vector<8x128xf32>
    %c0_13 = arith.constant 0 : index
    %c0_14 = arith.constant 0 : index
    %20 = vector.load %arg5[%c0_13, %c0_14] : memref<1x128xf32, #tpu.memory_space<vmem>>, vector<1x128xf32>
    %21 = vector.broadcast %20 : vector<1x128xf32> to vector<8x128xf32>
    %22 = arith.addf %19, %21 : vector<8x128xf32>
    %cst_15 = arith.constant 0.000000e+00 : f32
    %23 = vector.broadcast %cst_15 : f32 to vector<8x128xf32>
    %24 = arith.minimumf %22, %23 : vector<8x128xf32>
    %25 = math.exp %24 : vector<8x128xf32>
    %cst_16 = arith.constant 1.000000e+00 : f32
    %26 = vector.broadcast %cst_16 : f32 to vector<8x128xf32>
    %27 = arith.subf %25, %26 : vector<8x128xf32>
    %cst_17 = arith.constant 1.67326319 : f32
    %28 = vector.broadcast %cst_17 : f32 to vector<8x128xf32>
    %29 = arith.mulf %28, %27 : vector<8x128xf32>
    %cst_18 = arith.constant 0.000000e+00 : f32
    %30 = vector.broadcast %cst_18 : f32 to vector<8x128xf32>
    %31 = arith.cmpf ogt, %22, %30 : vector<8x128xf32>
    %32 = arith.select %31, %22, %29 : vector<8x128xi1>, vector<8x128xf32>
    %cst_19 = arith.constant 1.05070102 : f32
    %33 = vector.broadcast %cst_19 : f32 to vector<8x128xf32>
    %34 = arith.mulf %33, %32 : vector<8x128xf32>
    %35 = arith.addf %34, %17 : vector<8x128xf32>
    %c0_20 = arith.constant 0 : index
    %c0_21 = arith.constant 0 : index
    %36 = vector.load %arg6[%c0_20, %c0_21] : memref<128x128xf32, #tpu.memory_space<vmem>>, vector<128x128xf32>
    %cst_22 = arith.constant dense<0.000000e+00> : vector<8x128xf32>
    %37 = tpu.matmul %35, %36, %cst_22 {dimension_numbers = #tpu.dot_dimension_numbers<[1], [0], [0], [1], [0, 0, 1, 1], [], []>} : vector<8x128xf32>, vector<128x128xf32>, vector<8x128xf32> -> vector<8x128xf32>
    %c0_23 = arith.constant 0 : index
    %c0_24 = arith.constant 0 : index
    %38 = vector.load %arg7[%c0_23, %c0_24] : memref<1x128xf32, #tpu.memory_space<vmem>>, vector<1x128xf32>
    %39 = vector.broadcast %38 : vector<1x128xf32> to vector<8x128xf32>
    %40 = arith.addf %37, %39 : vector<8x128xf32>
    %cst_25 = arith.constant 0.000000e+00 : f32
    %41 = vector.broadcast %cst_25 : f32 to vector<8x128xf32>
    %42 = arith.minimumf %40, %41 : vector<8x128xf32>
    %43 = math.exp %42 : vector<8x128xf32>
    %cst_26 = arith.constant 1.000000e+00 : f32
    %44 = vector.broadcast %cst_26 : f32 to vector<8x128xf32>
    %45 = arith.subf %43, %44 : vector<8x128xf32>
    %cst_27 = arith.constant 1.67326319 : f32
    %46 = vector.broadcast %cst_27 : f32 to vector<8x128xf32>
    %47 = arith.mulf %46, %45 : vector<8x128xf32>
    %cst_28 = arith.constant 0.000000e+00 : f32
    %48 = vector.broadcast %cst_28 : f32 to vector<8x128xf32>
    %49 = arith.cmpf ogt, %40, %48 : vector<8x128xf32>
    %50 = arith.select %49, %40, %47 : vector<8x128xi1>, vector<8x128xf32>
    %cst_29 = arith.constant 1.05070102 : f32
    %51 = vector.broadcast %cst_29 : f32 to vector<8x128xf32>
    %52 = arith.mulf %51, %50 : vector<8x128xf32>
    %53 = arith.addf %52, %35 : vector<8x128xf32>
    %c0_30 = arith.constant 0 : index
    %c0_31 = arith.constant 0 : index
    %54 = vector.load %arg8[%c0_30, %c0_31] : memref<128x128xf32, #tpu.memory_space<vmem>>, vector<128x128xf32>
    %cst_32 = arith.constant dense<0.000000e+00> : vector<8x128xf32>
    %55 = tpu.matmul %53, %54, %cst_32 {dimension_numbers = #tpu.dot_dimension_numbers<[1], [0], [0], [1], [0, 0, 1, 1], [], []>} : vector<8x128xf32>, vector<128x128xf32>, vector<8x128xf32> -> vector<8x128xf32>
    %c0_33 = arith.constant 0 : index
    %c0_34 = arith.constant 0 : index
    %56 = vector.load %arg9[%c0_33, %c0_34] : memref<1x128xf32, #tpu.memory_space<vmem>>, vector<1x128xf32>
    %57 = vector.broadcast %56 : vector<1x128xf32> to vector<8x128xf32>
    %58 = arith.addf %55, %57 : vector<8x128xf32>
    %cst_35 = arith.constant 0.000000e+00 : f32
    %59 = vector.broadcast %cst_35 : f32 to vector<8x128xf32>
    %60 = arith.minimumf %58, %59 : vector<8x128xf32>
    %61 = math.exp %60 : vector<8x128xf32>
    %cst_36 = arith.constant 1.000000e+00 : f32
    %62 = vector.broadcast %cst_36 : f32 to vector<8x128xf32>
    %63 = arith.subf %61, %62 : vector<8x128xf32>
    %cst_37 = arith.constant 1.67326319 : f32
    %64 = vector.broadcast %cst_37 : f32 to vector<8x128xf32>
    %65 = arith.mulf %64, %63 : vector<8x128xf32>
    %cst_38 = arith.constant 0.000000e+00 : f32
    %66 = vector.broadcast %cst_38 : f32 to vector<8x128xf32>
    %67 = arith.cmpf ogt, %58, %66 : vector<8x128xf32>
    %68 = arith.select %67, %58, %65 : vector<8x128xi1>, vector<8x128xf32>
    %cst_39 = arith.constant 1.05070102 : f32
    %69 = vector.broadcast %cst_39 : f32 to vector<8x128xf32>
    %70 = arith.mulf %69, %68 : vector<8x128xf32>
    %71 = arith.addf %70, %53 : vector<8x128xf32>
    %c0_40 = arith.constant 0 : index
    %c0_41 = arith.constant 0 : index
    %72 = vector.load %arg10[%c0_40, %c0_41] : memref<128x128xf32, #tpu.memory_space<vmem>>, vector<128x128xf32>
    %cst_42 = arith.constant dense<0.000000e+00> : vector<8x128xf32>
    %73 = tpu.matmul %71, %72, %cst_42 {dimension_numbers = #tpu.dot_dimension_numbers<[1], [0], [0], [1], [0, 0, 1, 1], [], []>} : vector<8x128xf32>, vector<128x128xf32>, vector<8x128xf32> -> vector<8x128xf32>
    %c0_43 = arith.constant 0 : index
    %c0_44 = arith.constant 0 : index
    %74 = vector.load %arg11[%c0_43, %c0_44] : memref<1x128xf32, #tpu.memory_space<vmem>>, vector<1x128xf32>
    %75 = vector.broadcast %74 : vector<1x128xf32> to vector<8x128xf32>
    %76 = arith.addf %73, %75 : vector<8x128xf32>
    %cst_45 = arith.constant 0.000000e+00 : f32
    %77 = vector.broadcast %cst_45 : f32 to vector<8x128xf32>
    %78 = arith.minimumf %76, %77 : vector<8x128xf32>
    %79 = math.exp %78 : vector<8x128xf32>
    %cst_46 = arith.constant 1.000000e+00 : f32
    %80 = vector.broadcast %cst_46 : f32 to vector<8x128xf32>
    %81 = arith.subf %79, %80 : vector<8x128xf32>
    %cst_47 = arith.constant 1.67326319 : f32
    %82 = vector.broadcast %cst_47 : f32 to vector<8x128xf32>
    %83 = arith.mulf %82, %81 : vector<8x128xf32>
    %cst_48 = arith.constant 0.000000e+00 : f32
    %84 = vector.broadcast %cst_48 : f32 to vector<8x128xf32>
    %85 = arith.cmpf ogt, %76, %84 : vector<8x128xf32>
    %86 = arith.select %85, %76, %83 : vector<8x128xi1>, vector<8x128xf32>
    %cst_49 = arith.constant 1.05070102 : f32
    %87 = vector.broadcast %cst_49 : f32 to vector<8x128xf32>
    %88 = arith.mulf %87, %86 : vector<8x128xf32>
    %89 = arith.addf %88, %71 : vector<8x128xf32>
    %c0_50 = arith.constant 0 : index
    %c0_51 = arith.constant 0 : index
    %90 = vector.load %arg12[%c0_50, %c0_51] : memref<128x128xf32, #tpu.memory_space<vmem>>, vector<128x128xf32>
    %cst_52 = arith.constant dense<0.000000e+00> : vector<8x128xf32>
    %91 = tpu.matmul %89, %90, %cst_52 {dimension_numbers = #tpu.dot_dimension_numbers<[1], [0], [0], [1], [0, 0, 1, 1], [], []>} : vector<8x128xf32>, vector<128x128xf32>, vector<8x128xf32> -> vector<8x128xf32>
    %c0_53 = arith.constant 0 : index
    %c0_54 = arith.constant 0 : index
    %92 = vector.load %arg13[%c0_53, %c0_54] : memref<1x128xf32, #tpu.memory_space<vmem>>, vector<1x128xf32>
    %93 = vector.broadcast %92 : vector<1x128xf32> to vector<8x128xf32>
    %94 = arith.addf %91, %93 : vector<8x128xf32>
    %c0_55 = arith.constant 0 : index
    %c0_56 = arith.constant 0 : index
    %95 = vector.load %arg14[%c0_55, %c0_56] : memref<8x128xf32, #tpu.memory_space<vmem>>, vector<8x128xf32>
    tpu.vector_store %arg14[%c0_55, %c0_56], %94 {strides = array<i32>} : memref<8x128xf32, #tpu.memory_space<vmem>>, vector<8x128xf32>,
    return
  }
  func.func @transform_0(%arg0: i32) -> (i32, i32) {
    %c0_i32 = arith.constant 0 : i32
    %c0_i32_0 = arith.constant 0 : i32
    return %arg0, %c0_i32 : i32, i32
  }
  func.func @transform_1(%arg0: i32) -> (i32, i32) {
    %c0_i32 = arith.constant 0 : i32
    %c0_i32_0 = arith.constant 0 : i32
    %c0_i32_1 = arith.constant 0 : i32
    return %c0_i32, %c0_i32_0 : i32, i32
  }
  func.func @transform_2(%arg0: i32) -> (i32, i32) {
    %c0_i32 = arith.constant 0 : i32
    %c0_i32_0 = arith.constant 0 : i32
    %c0_i32_1 = arith.constant 0 : i32
    return %c0_i32, %c0_i32_0 : i32, i32
  }
  func.func @transform_3(%arg0: i32) -> (i32, i32) {
    %c0_i32 = arith.constant 0 : i32
    %c0_i32_0 = arith.constant 0 : i32
    %c0_i32_1 = arith.constant 0 : i32
    return %c0_i32, %c0_i32_0 : i32, i32
  }
  func.func @transform_4(%arg0: i32) -> (i32, i32) {
    %c0_i32 = arith.constant 0 : i32
    %c0_i32_0 = arith.constant 0 : i32
    %c0_i32_1 = arith.constant 0 : i32
    return %c0_i32, %c0_i32_0 : i32, i32
  }
  func.func @transform_5(%arg0: i32) -> (i32, i32) {
    %c0_i32 = arith.constant 0 : i32
    %c0_i32_0 = arith.constant 0 : i32
    %c0_i32_1 = arith.constant 0 : i32
    return %c0_i32, %c0_i32_0 : i32, i32
  }
  func.func @transform_6(%arg0: i32) -> (i32, i32) {
    %c0_i32 = arith.constant 0 : i32
    %c0_i32_0 = arith.constant 0 : i32
    %c0_i32_1 = arith.constant 0 : i32
    return %c0_i32, %c0_i32_0 : i32, i32
  }
  func.func @transform_7(%arg0: i32) -> (i32, i32) {
    %c0_i32 = arith.constant 0 : i32
    %c0_i32_0 = arith.constant 0 : i32
    %c0_i32_1 = arith.constant 0 : i32
    return %c0_i32, %c0_i32_0 : i32, i32
  }
  func.func @transform_8(%arg0: i32) -> (i32, i32) {
    %c0_i32 = arith.constant 0 : i32
    %c0_i32_0 = arith.constant 0 : i32
    %c0_i32_1 = arith.constant 0 : i32
    return %c0_i32, %c0_i32_0 : i32, i32
  }
  func.func @transform_9(%arg0: i32) -> (i32, i32) {
    %c0_i32 = arith.constant 0 : i32
    %c0_i32_0 = arith.constant 0 : i32
    %c0_i32_1 = arith.constant 0 : i32
    return %c0_i32, %c0_i32_0 : i32, i32
  }
  func.func @transform_10(%arg0: i32) -> (i32, i32) {
    %c0_i32 = arith.constant 0 : i32
    %c0_i32_0 = arith.constant 0 : i32
    %c0_i32_1 = arith.constant 0 : i32
    return %c0_i32, %c0_i32_0 : i32, i32
  }
  func.func @transform_11(%arg0: i32) -> (i32, i32) {
    %c0_i32 = arith.constant 0 : i32
    %c0_i32_0 = arith.constant 0 : i32
    %c0_i32_1 = arith.constant 0 : i32
    return %c0_i32, %c0_i32_0 : i32, i32
  }
  func.func @transform_12(%arg0: i32) -> (i32, i32) {
    %c0_i32 = arith.constant 0 : i32
    %c0_i32_0 = arith.constant 0 : i32
    %c0_i32_1 = arith.constant 0 : i32
    return %c0_i32, %c0_i32_0 : i32, i32
  }
  func.func @transform_13(%arg0: i32) -> (i32, i32) {
    %c0_i32 = arith.constant 0 : i32
    %c0_i32_0 = arith.constant 0 : i32
    return %arg0, %c0_i32 : i32, i32
  }
}

</mosaic_0001>

<llo_original>
// kernel: tpu_custom_call.1
$region0: #{tpu_custom_call.1}
  #allocation0 [shape = 'u32[]', space=smem, size = 0x4, offset = 0x4, fixed_abs, tag = 'smem constant byte address 0x4 - core index']
  #allocation1 [shape = 'u32[144,128]{1,0:T(1,128)}', space=vmem, size = 0x12000, scoped, tag = 'internal scratch']
  %s0 = inlined_call_operand.hbm [shape: f32[8,128], index: 0, kind: input, shape index: {}]
  %s1 = inlined_call_operand.hbm [shape: f32[128,128], index: 1, kind: input, shape index: {}]
  %s2 = inlined_call_operand.vmem [shape: f32[1,128], index: 2, kind: input, shape index: {}]
  %s3 = inlined_call_operand.hbm [shape: f32[128,128], index: 3, kind: input, shape index: {}]
  %s4 = inlined_call_operand.vmem [shape: f32[1,128], index: 4, kind: input, shape index: {}]
  %s5 = inlined_call_operand.hbm [shape: f32[128,128], index: 5, kind: input, shape index: {}]
  %s6 = inlined_call_operand.vmem [shape: f32[1,128], index: 6, kind: input, shape index: {}]
  %s7 = inlined_call_operand.hbm [shape: f32[128,128], index: 7, kind: input, shape index: {}]
  %s8 = inlined_call_operand.vmem [shape: f32[1,128], index: 8, kind: input, shape index: {}]
  %s9 = inlined_call_operand.hbm [shape: f32[128,128], index: 9, kind: input, shape index: {}]
  %s10 = inlined_call_operand.vmem [shape: f32[1,128], index: 10, kind: input, shape index: {}]
  %s11 = inlined_call_operand.hbm [shape: f32[128,128], index: 11, kind: input, shape index: {}]
  %s12 = inlined_call_operand.vmem [shape: f32[1,128], index: 12, kind: input, shape index: {}]
  %s13 = inlined_call_operand.hbm [shape: f32[8,128], index: 13, kind: output, shape index: {}]
  %s14 = sld [smem:[#allocation0]]
  $region90: #{tpu_custom_call.1} parent=0
    _
  %s16 = ssub.s32 1, %s14
  %s17 = scalar_select 0, %s16, %s14
  $region1: #{tpu_custom_call.1} parent=0
    #allocation2 [shape = 'u8[4096]{0}', space=vmem, size = 0x1000, scoped, tag = 'input window, operand 0, single buffered']
    #allocation3 [shape = 's32[1]{0}', space=sflag, size = 0x4, scoped, tag = 'scoped memory for tpu_custom_call.1']
    #allocation4 [shape = 's32[1]{0}', space=sflag, size = 0x4, scoped, tag = 'scoped memory for tpu_custom_call.1']
    #allocation5 [shape = 'u8[65536]{0}', space=vmem, size = 0x10000, scoped, tag = 'input window, operand 1, single buffered']
    #allocation6 [shape = 's32[1]{0}', space=sflag, size = 0x4, scoped, tag = 'scoped memory for tpu_custom_call.1']
    #allocation7 [shape = 'u8[65536]{0}', space=vmem, size = 0x10000, scoped, tag = 'input window, operand 3, single buffered']
    #allocation8 [shape = 'u8[65536]{0}', space=vmem, size = 0x10000, scoped, tag = 'input window, operand 5, single buffered']
    #allocation9 [shape = 's32[1]{0}', space=sflag, size = 0x4, scoped, tag = 'scoped memory for tpu_custom_call.1']
    #allocation10 [shape = 'u8[65536]{0}', space=vmem, size = 0x10000, scoped, tag = 'input window, operand 7, single buffered']
    #allocation11 [shape = 'u8[65536]{0}', space=vmem, size = 0x10000, scoped, tag = 'input window, operand 9, single buffered']
    #allocation12 [shape = 's32[1]{0}', space=sflag, size = 0x4, scoped, tag = 'scoped memory for tpu_custom_call.1']
    #allocation13 [shape = 'u8[65536]{0}', space=vmem, size = 0x10000, scoped, tag = 'input window, operand 11, single buffered']
    #allocation14 [shape = 'u8[4096]{0}', space=vmem, size = 0x1000, scoped, tag = 'output window, operand 0, single buffered']
    %18 = vsyncpa [#allocation3], 0
    %19 = vsyncpa [#allocation6], 0
    %20 = vsyncpa [#allocation9], 0
    %21 = vsyncpa [#allocation12], 0
    %22 = vsyncpa [#allocation4], 0
    // Predicated region
    $region2: #{tpu_custom_call.1} parent=1 // pred_check
      _
    $region3: #{tpu_custom_call.1} parent=1 // pred_check_branch
      %24 = sbr.rel (0) target = $region5
    $region4: #{tpu_custom_call.1} parent=1 // pred_region
      %s26 = ssub.s32 128, 128
      %27 = vsyncadd [#allocation3], %s26
      %s29 = sshll.u32 [#allocation2], 4
      %s30 = int_to_ptr.vmem [resolvable:$true] %s29
      %32 = dma.hbm_to_vmem [thread:$0]  %s0, 128, %s30, [#allocation3]
    $region5: #{tpu_custom_call.1} parent=1 // pred_fallthru
      _
    // Predicated region
    $region6: #{tpu_custom_call.1} parent=1 // pred_check
      _
    $region7: #{tpu_custom_call.1} parent=1 // pred_check_branch
      %34 = sbr.rel (0) target = $region9
    $region8: #{tpu_custom_call.1} parent=1 // pred_region
      %s36 = ssub.s32 2048, 2048
      %37 = vsyncadd [#allocation6], %s36
      %s38 = sshll.u32 [#allocation5], 4
      %s39 = int_to_ptr.vmem [resolvable:$true] %s38
      %44 = dma.hbm_to_vmem [thread:$0]  %s1, 2048, %s39, [#allocation6], 128, 128, 8
    $region9: #{tpu_custom_call.1} parent=1 // pred_fallthru
      _
    // Predicated region
    $region10: #{tpu_custom_call.1} parent=1 // pred_check
      _
    $region11: #{tpu_custom_call.1} parent=1 // pred_check_branch
      %46 = sbr.rel (0) target = $region13
    $region12: #{tpu_custom_call.1} parent=1 // pred_region
      _
    $region13: #{tpu_custom_call.1} parent=1 // pred_fallthru
      _
    // Predicated region
    $region14: #{tpu_custom_call.1} parent=1 // pred_check
      _
    $region15: #{tpu_custom_call.1} parent=1 // pred_check_branch
      %48 = sbr.rel (0) target = $region17
    $region16: #{tpu_custom_call.1} parent=1 // pred_region
      %s50 = ssub.s32 2048, 2048
      %51 = vsyncadd [#allocation6], %s50
      %s52 = sshll.u32 [#allocation7], 4
      %s53 = int_to_ptr.vmem [resolvable:$true] %s52
      %58 = dma.hbm_to_vmem [thread:$0]  %s3, 2048, %s53, [#allocation6], 128, 128, 8
    $region17: #{tpu_custom_call.1} parent=1 // pred_fallthru
      _
    // Predicated region
    $region18: #{tpu_custom_call.1} parent=1 // pred_check
      _
    $region19: #{tpu_custom_call.1} parent=1 // pred_check_branch
      %60 = sbr.rel (0) target = $region21
    $region20: #{tpu_custom_call.1} parent=1 // pred_region
      _
    $region21: #{tpu_custom_call.1} parent=1 // pred_fallthru
      _
    // Predicated region
    $region22: #{tpu_custom_call.1} parent=1 // pred_check
      _
    $region23: #{tpu_custom_call.1} parent=1 // pred_check_branch
      %62 = sbr.rel (0) target = $region25
    $region24: #{tpu_custom_call.1} parent=1 // pred_region
      %s64 = ssub.s32 2048, 2048
      %65 = vsyncadd [#allocation9], %s64
      %s66 = sshll.u32 [#allocation8], 4
      %s67 = int_to_ptr.vmem [resolvable:$true] %s66
      %72 = dma.hbm_to_vmem [thread:$0]  %s5, 2048, %s67, [#allocation9], 128, 128, 8
    $region25: #{tpu_custom_call.1} parent=1 // pred_fallthru
      _
    // Predicated region
    $region26: #{tpu_custom_call.1} parent=1 // pred_check
      _
    $region27: #{tpu_custom_call.1} parent=1 // pred_check_branch
      %74 = sbr.rel (0) target = $region29
    $region28: #{tpu_custom_call.1} parent=1 // pred_region
      _
    $region29: #{tpu_custom_call.1} parent=1 // pred_fallthru
      _
    // Predicated region
    $region30: #{tpu_custom_call.1} parent=1 // pred_check
      _
    $region31: #{tpu_custom_call.1} parent=1 // pred_check_branch
      %76 = sbr.rel (0) target = $region33
    $region32: #{tpu_custom_call.1} parent=1 // pred_region
      %s78 = ssub.s32 2048, 2048
      %79 = vsyncadd [#allocation9], %s78
      %s80 = sshll.u32 [#allocation10], 4
      %s81 = int_to_ptr.vmem [resolvable:$true] %s80
      %86 = dma.hbm_to_vmem [thread:$0]  %s7, 2048, %s81, [#allocation9], 128, 128, 8
    $region33: #{tpu_custom_call.1} parent=1 // pred_fallthru
      _
    // Predicated region
    $region34: #{tpu_custom_call.1} parent=1 // pred_check
      _
    $region35: #{tpu_custom_call.1} parent=1 // pred_check_branch
      %88 = sbr.rel (0) target = $region37
    $region36: #{tpu_custom_call.1} parent=1 // pred_region
      _
    $region37: #{tpu_custom_call.1} parent=1 // pred_fallthru
      _
    // Predicated region
    $region38: #{tpu_custom_call.1} parent=1 // pred_check
      _
    $region39: #{tpu_custom_call.1} parent=1 // pred_check_branch
      %90 = sbr.rel (0) target = $region41
    $region40: #{tpu_custom_call.1} parent=1 // pred_region
      %s92 = ssub.s32 2048, 2048
      %93 = vsyncadd [#allocation12], %s92
      %s94 = sshll.u32 [#allocation11], 4
      %s95 = int_to_ptr.vmem [resolvable:$true] %s94
      %100 = dma.hbm_to_vmem [thread:$0]  %s9, 2048, %s95, [#allocation12], 128, 128, 8
    $region41: #{tpu_custom_call.1} parent=1 // pred_fallthru
      _
    // Predicated region
    $region42: #{tpu_custom_call.1} parent=1 // pred_check
      _
    $region43: #{tpu_custom_call.1} parent=1 // pred_check_branch
      %102 = sbr.rel (0) target = $region45
    $region44: #{tpu_custom_call.1} parent=1 // pred_region
      _
    $region45: #{tpu_custom_call.1} parent=1 // pred_fallthru
      _
    // Predicated region
    $region46: #{tpu_custom_call.1} parent=1 // pred_check
      _
    $region47: #{tpu_custom_call.1} parent=1 // pred_check_branch
      %104 = sbr.rel (0) target = $region49
    $region48: #{tpu_custom_call.1} parent=1 // pred_region
      %s106 = ssub.s32 2048, 2048
      %107 = vsyncadd [#allocation12], %s106
      %s108 = sshll.u32 [#allocation13], 4
      %s109 = int_to_ptr.vmem [resolvable:$true] %s108
      %114 = dma.hbm_to_vmem [thread:$0]  %s11, 2048, %s109, [#allocation12], 128, 128, 8
    $region49: #{tpu_custom_call.1} parent=1 // pred_fallthru
      _
    // Predicated region
    $region50: #{tpu_custom_call.1} parent=1 // pred_check
      _
    $region51: #{tpu_custom_call.1} parent=1 // pred_check_branch
      %116 = sbr.rel (0) target = $region53
    $region52: #{tpu_custom_call.1} parent=1 // pred_region
      _
    $region53: #{tpu_custom_call.1} parent=1 // pred_fallthru
      _
    // Predicated region
    $region54: #{tpu_custom_call.1} parent=1 // pred_check
      _
    $region55: #{tpu_custom_call.1} parent=1 // pred_check_branch
      %118 = sbr.rel (0) target = $region57
    $region56: #{tpu_custom_call.1} parent=1 // pred_region
      %119 = dma.done [#allocation3], 128
    $region57: #{tpu_custom_call.1} parent=1 // pred_fallthru
      _
    // Predicated region
    $region58: #{tpu_custom_call.1} parent=1 // pred_check
      _
    $region59: #{tpu_custom_call.1} parent=1 // pred_check_branch
      %121 = sbr.rel (0) target = $region61
    $region60: #{tpu_custom_call.1} parent=1 // pred_region
      %122 = dma.done [#allocation6], 2048
    $region61: #{tpu_custom_call.1} parent=1 // pred_fallthru
      _
    // Predicated region
    $region62: #{tpu_custom_call.1} parent=1 // pred_check
      _
    $region63: #{tpu_custom_call.1} parent=1 // pred_check_branch
      %124 = sbr.rel (0) target = $region65
    $region64: #{tpu_custom_call.1} parent=1 // pred_region
      %125 = dma.done [#allocation6], 2048
    $region65: #{tpu_custom_call.1} parent=1 // pred_fallthru
      _
    // Predicated region
    $region66: #{tpu_custom_call.1} parent=1 // pred_check
      _
    $region67: #{tpu_custom_call.1} parent=1 // pred_check_branch
      %127 = sbr.rel (0) target = $region69
    $region68: #{tpu_custom_call.1} parent=1 // pred_region
      %128 = dma.done [#allocation9], 2048
    $region69: #{tpu_custom_call.1} parent=1 // pred_fallthru
      _
    // Predicated region
    $region70: #{tpu_custom_call.1} parent=1 // pred_check
      _
    $region71: #{tpu_custom_call.1} parent=1 // pred_check_branch
      %130 = sbr.rel (0) target = $region73
    $region72: #{tpu_custom_call.1} parent=1 // pred_region
      %131 = dma.done [#allocation9], 2048
    $region73: #{tpu_custom_call.1} parent=1 // pred_fallthru
      _
    // Predicated region
    $region74: #{tpu_custom_call.1} parent=1 // pred_check
      _
    $region75: #{tpu_custom_call.1} parent=1 // pred_check_branch
      %133 = sbr.rel (0) target = $region77
    $region76: #{tpu_custom_call.1} parent=1 // pred_region
      %134 = dma.done [#allocation12], 2048
    $region77: #{tpu_custom_call.1} parent=1 // pred_fallthru
      _
    // Predicated region
    $region78: #{tpu_custom_call.1} parent=1 // pred_check
      _
    $region79: #{tpu_custom_call.1} parent=1 // pred_check_branch
      %136 = sbr.rel (0) target = $region81
    $region80: #{tpu_custom_call.1} parent=1 // pred_region
      %137 = dma.done [#allocation12], 2048
    $region81: #{tpu_custom_call.1} parent=1 // pred_fallthru
      _
    %v138 = vld [vmem:[#allocation2] sm:$0xff]
    %v139 = vld [vmem:[#allocation5] sm:$0xff]
    %v140 = vld [vmem:[#allocation5 + $0x8] sm:$0xff]
    %v141 = vld [vmem:[#allocation5 + $0x10] sm:$0xff]
    %v142 = vld [vmem:[#allocation5 + $0x18] sm:$0xff]
    %v143 = vld [vmem:[#allocation5 + $0x20] sm:$0xff]
    %v144 = vld [vmem:[#allocation5 + $0x28] sm:$0xff]
    %v145 = vld [vmem:[#allocation5 + $0x30] sm:$0xff]
    %v146 = vld [vmem:[#allocation5 + $0x38] sm:$0xff]
    %v147 = vld [vmem:[#allocation5 + $0x40] sm:$0xff]
    %v148 = vld [vmem:[#allocation5 + $0x48] sm:$0xff]
    %v149 = vld [vmem:[#allocation5 + $0x50] sm:$0xff]
    %v150 = vld [vmem:[#allocation5 + $0x58] sm:$0xff]
    %v151 = vld [vmem:[#allocation5 + $0x60] sm:$0xff]
    %v152 = vld [vmem:[#allocation5 + $0x68] sm:$0xff]
    %v153 = vld [vmem:[#allocation5 + $0x70] sm:$0xff]
    %v154 = vld [vmem:[#allocation5 + $0x78] sm:$0xff]
    %v155 = vld [vmem:[%s2] sm:$0x1]
    %v157 = vlaneseq
    %v158 = vshrl.u32 %v157, 7
    %v159 = vsub.s32 0, %v158
    %v160 = vrot.slane %v155, %v159
    %162 = vmatprep.subr.mxu0 0.0
    %163 = vmatpush1.msra.mxu0 %v154
    %164 = vmatprep.subr.mxu0 0.0
    %165 = vmatpush1.msra.mxu0 %v153
    %166 = vmatprep.subr.mxu0 0.0
    %167 = vmatpush1.msra.mxu0 %v152
    %168 = vmatprep.subr.mxu0 0.0
    %169 = vmatpush1.msra.mxu0 %v151
    %170 = vmatprep.subr.mxu0 0.0
    %171 = vmatpush1.msra.mxu0 %v150
    %172 = vmatprep.subr.mxu0 0.0
    %173 = vmatpush1.msra.mxu0 %v149
    %174 = vmatprep.subr.mxu0 0.0
    %175 = vmatpush1.msra.mxu0 %v148
    %176 = vmatprep.subr.mxu0 0.0
    %177 = vmatpush1.msra.mxu0 %v147
    %178 = vmatprep.subr.mxu0 0.0
    %179 = vmatpush1.msra.mxu0 %v146
    %180 = vmatprep.subr.mxu0 0.0
    %181 = vmatpush1.msra.mxu0 %v145
    %182 = vmatprep.subr.mxu0 0.0
    %183 = vmatpush1.msra.mxu0 %v144
    %184 = vmatprep.subr.mxu0 0.0
    %185 = vmatpush1.msra.mxu0 %v143
    %186 = vmatprep.subr.mxu0 0.0
    %187 = vmatpush1.msra.mxu0 %v142
    %188 = vmatprep.subr.mxu0 0.0
    %189 = vmatpush1.msra.mxu0 %v141
    %190 = vmatprep.subr.mxu0 0.0
    %191 = vmatpush1.msra.mxu0 %v140
    %192 = vmatprep.subr.mxu0 0.0
    %193 = vmatpush1.msra.mxu0 %v139
    %194 = vmatprep.subr.mxu0 0.0
    %195 = vmatpush2.msra.mxu0 0.0
    %196 = vmatprep.subr.mxu0 0.0
    %197 = vmatpush2.msra.mxu0 0.0
    %198 = vmatprep.subr.mxu0 0.0
    %199 = vmatpush2.msra.mxu0 0.0
    %200 = vmatprep.subr.mxu0 0.0
    %201 = vmatpush2.msra.mxu0 0.0
    %202 = vmatprep.subr.mxu0 0.0
    %203 = vmatpush2.msra.mxu0 0.0
    %204 = vmatprep.subr.mxu0 0.0
    %205 = vmatpush2.msra.mxu0 0.0
    %206 = vmatprep.subr.mxu0 0.0
    %207 = vmatpush2.msra.mxu0 0.0
    %208 = vmatprep.subr.mxu0 0.0
    %209 = vmatpush2.msra.mxu0 0.0
    %210 = vmatprep.subr.mxu0 0.0
    %211 = vmatpush2.msra.mxu0 0.0
    %212 = vmatprep.subr.mxu0 0.0
    %213 = vmatpush2.msra.mxu0 0.0
    %214 = vmatprep.subr.mxu0 0.0
    %215 = vmatpush2.msra.mxu0 0.0
    %216 = vmatprep.subr.mxu0 0.0
    %217 = vmatpush2.msra.mxu0 0.0
    %218 = vmatprep.subr.mxu0 0.0
    %219 = vmatpush2.msra.mxu0 0.0
    %220 = vmatprep.subr.mxu0 0.0
    %221 = vmatpush2.msra.mxu0 0.0
    %222 = vmatprep.subr.mxu0 0.0
    %223 = vmatpush2.msra.mxu0 0.0
    %224 = vmatprep.subr.mxu0 0.0
    %225 = vmatpush2.msra.mxu0 0.0
    %226 = vmatprep.mubr.f32.mxu0 0.0
    %227 = vmatmul.mubr.f32.gmra.mxu0 %v138
    %v228 = vpop.f32.mrf.mxu0
    %v229 = vadd.f32 %v160, %v228
    %v230 = vpop.f32.mrf.mxu0
    %231 = vdwg.mxu0
    %v232 = vmin.f32 %v229, 0.0
    %v233 = vmul.f32 %v232, 1.442695
    %v234 = vpow.pop %v233
    %v235 = vsub.f32 %v234, 1.0
    %v236 = vmul.f32 %v235, 1.6732632
    %vm237 = vcmp.gt.f32.partialorder %v229, 0.0
    %v238 = vsel %vm237, %v229, %v236
    %v239 = vmul.f32 %v238, 1.050701
    %v240 = vld [vmem:[#allocation7] sm:$0xff]
    %v241 = vld [vmem:[#allocation7 + $0x8] sm:$0xff]
    %v242 = vld [vmem:[#allocation7 + $0x10] sm:$0xff]
    %v243 = vld [vmem:[#allocation7 + $0x18] sm:$0xff]
    %v244 = vld [vmem:[#allocation7 + $0x20] sm:$0xff]
    %v245 = vld [vmem:[#allocation7 + $0x28] sm:$0xff]
    %v246 = vld [vmem:[#allocation7 + $0x30] sm:$0xff]
    %v247 = vld [vmem:[#allocation7 + $0x38] sm:$0xff]
    %v248 = vld [vmem:[#allocation7 + $0x40] sm:$0xff]
    %v249 = vld [vmem:[#allocation7 + $0x48] sm:$0xff]
    %v250 = vld [vmem:[#allocation7 + $0x50] sm:$0xff]
    %v251 = vld [vmem:[#allocation7 + $0x58] sm:$0xff]
    %v252 = vld [vmem:[#allocation7 + $0x60] sm:$0xff]
    %v253 = vld [vmem:[#allocation7 + $0x68] sm:$0xff]
    %v254 = vld [vmem:[#allocation7 + $0x70] sm:$0xff]
    %v255 = vld [vmem:[#allocation7 + $0x78] sm:$0xff]
    %v256 = vld [vmem:[%s4] sm:$0x1]
    %v258 = vlaneseq
    %v259 = vshrl.u32 %v258, 7
    %v260 = vsub.s32 0, %v259
    %v261 = vrot.slane %v256, %v260
    %263 = vmatprep.subr.mxu0 0.0
    %264 = vmatpush1.msra.mxu0 %v255
    %265 = vmatprep.subr.mxu0 0.0
    %266 = vmatpush1.msra.mxu0 %v254
    %267 = vmatprep.subr.mxu0 0.0
    %268 = vmatpush1.msra.mxu0 %v253
    %269 = vmatprep.subr.mxu0 0.0
    %270 = vmatpush1.msra.mxu0 %v252
    %271 = vmatprep.subr.mxu0 0.0
    %272 = vmatpush1.msra.mxu0 %v251
    %273 = vmatprep.subr.mxu0 0.0
    %274 = vmatpush1.msra.mxu0 %v250
    %275 = vmatprep.subr.mxu0 0.0
    %276 = vmatpush1.msra.mxu0 %v249
    %277 = vmatprep.subr.mxu0 0.0
    %278 = vmatpush1.msra.mxu0 %v248
    %279 = vmatprep.subr.mxu0 0.0
    %280 = vmatpush1.msra.mxu0 %v247
    %281 = vmatprep.subr.mxu0 0.0
    %282 = vmatpush1.msra.mxu0 %v246
    %283 = vmatprep.subr.mxu0 0.0
    %284 = vmatpush1.msra.mxu0 %v245
    %285 = vmatprep.subr.mxu0 0.0
    %286 = vmatpush1.msra.mxu0 %v244
    %287 = vmatprep.subr.mxu0 0.0
    %288 = vmatpush1.msra.mxu0 %v243
    %289 = vmatprep.subr.mxu0 0.0
    %290 = vmatpush1.msra.mxu0 %v242
    %291 = vmatprep.subr.mxu0 0.0
    %292 = vmatpush1.msra.mxu0 %v241
    %293 = vmatprep.subr.mxu0 0.0
    %294 = vmatpush1.msra.mxu0 %v240
    %295 = vmatprep.subr.mxu0 0.0
    %296 = vmatpush2.msra.mxu0 0.0
    %297 = vmatprep.subr.mxu0 0.0
    %298 = vmatpush2.msra.mxu0 0.0
    %299 = vmatprep.subr.mxu0 0.0
    %300 = vmatpush2.msra.mxu0 0.0
    %301 = vmatprep.subr.mxu0 0.0
    %302 = vmatpush2.msra.mxu0 0.0
    %303 = vmatprep.subr.mxu0 0.0
    %304 = vmatpush2.msra.mxu0 0.0
    %305 = vmatprep.subr.mxu0 0.0
    %306 = vmatpush2.msra.mxu0 0.0
    %307 = vmatprep.subr.mxu0 0.0
    %308 = vmatpush2.msra.mxu0 0.0
    %309 = vmatprep.subr.mxu0 0.0
    %310 = vmatpush2.msra.mxu0 0.0
    %311 = vmatprep.subr.mxu0 0.0
    %312 = vmatpush2.msra.mxu0 0.0
    %313 = vmatprep.subr.mxu0 0.0
    %314 = vmatpush2.msra.mxu0 0.0
    %315 = vmatprep.subr.mxu0 0.0
    %316 = vmatpush2.msra.mxu0 0.0
    %317 = vmatprep.subr.mxu0 0.0
    %318 = vmatpush2.msra.mxu0 0.0
    %319 = vmatprep.subr.mxu0 0.0
    %320 = vmatpush2.msra.mxu0 0.0
    %321 = vmatprep.subr.mxu0 0.0
    %322 = vmatpush2.msra.mxu0 0.0
    %323 = vmatprep.subr.mxu0 0.0
    %324 = vmatpush2.msra.mxu0 0.0
    %325 = vmatprep.subr.mxu0 0.0
    %326 = vmatpush2.msra.mxu0 0.0
    %327 = vmatprep.mubr.f32.mxu0 0.0
    %328 = vmatmul.mubr.f32.gmra.mxu0 %v239
    %v329 = vpop.f32.mrf.mxu0
    %v330 = vadd.f32 %v261, %v329
    %v331 = vpop.f32.mrf.mxu0
    %332 = vdwg.mxu0
    %v333 = vmin.f32 %v330, 0.0
    %v334 = vmul.f32 %v333, 1.442695
    %v335 = vpow.pop %v334
    %v336 = vsub.f32 %v335, 1.0
    %v337 = vmul.f32 %v336, 1.6732632
    %vm338 = vcmp.gt.f32.partialorder %v330, 0.0
    %v339 = vsel %vm338, %v330, %v337
    %v340 = vmul.f32 %v339, 1.050701
    %v341 = vadd.f32 %v340, %v239
    %v342 = vld [vmem:[#allocation8] sm:$0xff]
    %v343 = vld [vmem:[#allocation8 + $0x8] sm:$0xff]
    %v344 = vld [vmem:[#allocation8 + $0x10] sm:$0xff]
    %v345 = vld [vmem:[#allocation8 + $0x18] sm:$0xff]
    %v346 = vld [vmem:[#allocation8 + $0x20] sm:$0xff]
    %v347 = vld [vmem:[#allocation8 + $0x28] sm:$0xff]
    %v348 = vld [vmem:[#allocation8 + $0x30] sm:$0xff]
    %v349 = vld [vmem:[#allocation8 + $0x38] sm:$0xff]
    %v350 = vld [vmem:[#allocation8 + $0x40] sm:$0xff]
    %v351 = vld [vmem:[#allocation8 + $0x48] sm:$0xff]
    %v352 = vld [vmem:[#allocation8 + $0x50] sm:$0xff]
    %v353 = vld [vmem:[#allocation8 + $0x58] sm:$0xff]
    %v354 = vld [vmem:[#allocation8 + $0x60] sm:$0xff]
    %v355 = vld [vmem:[#allocation8 + $0x68] sm:$0xff]
    %v356 = vld [vmem:[#allocation8 + $0x70] sm:$0xff]
    %v357 = vld [vmem:[#allocation8 + $0x78] sm:$0xff]
    %v358 = vld [vmem:[%s6] sm:$0x1]
    %v360 = vlaneseq
    %v361 = vshrl.u32 %v360, 7
    %v362 = vsub.s32 0, %v361
    %v363 = vrot.slane %v358, %v362
    %365 = vmatprep.subr.mxu0 0.0
    %366 = vmatpush1.msra.mxu0 %v357
    %367 = vmatprep.subr.mxu0 0.0
    %368 = vmatpush1.msra.mxu0 %v356
    %369 = vmatprep.subr.mxu0 0.0
    %370 = vmatpush1.msra.mxu0 %v355
    %371 = vmatprep.subr.mxu0 0.0
    %372 = vmatpush1.msra.mxu0 %v354
    %373 = vmatprep.subr.mxu0 0.0
    %374 = vmatpush1.msra.mxu0 %v353
    %375 = vmatprep.subr.mxu0 0.0
    %376 = vmatpush1.msra.mxu0 %v352
    %377 = vmatprep.subr.mxu0 0.0
    %378 = vmatpush1.msra.mxu0 %v351
    %379 = vmatprep.subr.mxu0 0.0
    %380 = vmatpush1.msra.mxu0 %v350
    %381 = vmatprep.subr.mxu0 0.0
    %382 = vmatpush1.msra.mxu0 %v349
    %383 = vmatprep.subr.mxu0 0.0
    %384 = vmatpush1.msra.mxu0 %v348
    %385 = vmatprep.subr.mxu0 0.0
    %386 = vmatpush1.msra.mxu0 %v347
    %387 = vmatprep.subr.mxu0 0.0
    %388 = vmatpush1.msra.mxu0 %v346
    %389 = vmatprep.subr.mxu0 0.0
    %390 = vmatpush1.msra.mxu0 %v345
    %391 = vmatprep.subr.mxu0 0.0
    %392 = vmatpush1.msra.mxu0 %v344
    %393 = vmatprep.subr.mxu0 0.0
    %394 = vmatpush1.msra.mxu0 %v343
    %395 = vmatprep.subr.mxu0 0.0
    %396 = vmatpush1.msra.mxu0 %v342
    %397 = vmatprep.subr.mxu0 0.0
    %398 = vmatpush2.msra.mxu0 0.0
    %399 = vmatprep.subr.mxu0 0.0
    %400 = vmatpush2.msra.mxu0 0.0
    %401 = vmatprep.subr.mxu0 0.0
    %402 = vmatpush2.msra.mxu0 0.0
    %403 = vmatprep.subr.mxu0 0.0
    %404 = vmatpush2.msra.mxu0 0.0
    %405 = vmatprep.subr.mxu0 0.0
    %406 = vmatpush2.msra.mxu0 0.0
    %407 = vmatprep.subr.mxu0 0.0
    %408 = vmatpush2.msra.mxu0 0.0
    %409 = vmatprep.subr.mxu0 0.0
    %410 = vmatpush2.msra.mxu0 0.0
    %411 = vmatprep.subr.mxu0 0.0
    %412 = vmatpush2.msra.mxu0 0.0
    %413 = vmatprep.subr.mxu0 0.0
    %414 = vmatpush2.msra.mxu0 0.0
    %415 = vmatprep.subr.mxu0 0.0
    %416 = vmatpush2.msra.mxu0 0.0
    %417 = vmatprep.subr.mxu0 0.0
    %418 = vmatpush2.msra.mxu0 0.0
    %419 = vmatprep.subr.mxu0 0.0
    %420 = vmatpush2.msra.mxu0 0.0
    %421 = vmatprep.subr.mxu0 0.0
    %422 = vmatpush2.msra.mxu0 0.0
    %423 = vmatprep.subr.mxu0 0.0
    %424 = vmatpush2.msra.mxu0 0.0
    %425 = vmatprep.subr.mxu0 0.0
    %426 = vmatpush2.msra.mxu0 0.0
    %427 = vmatprep.subr.mxu0 0.0
    %428 = vmatpush2.msra.mxu0 0.0
    %429 = vmatprep.mubr.f32.mxu0 0.0
    %430 = vmatmul.mubr.f32.gmra.mxu0 %v341
    %v431 = vpop.f32.mrf.mxu0
    %v432 = vadd.f32 %v363, %v431
    %v433 = vpop.f32.mrf.mxu0
    %434 = vdwg.mxu0
    %v435 = vmin.f32 %v432, 0.0
    %v436 = vmul.f32 %v435, 1.442695
    %v437 = vpow.pop %v436
    %v438 = vsub.f32 %v437, 1.0
    %v439 = vmul.f32 %v438, 1.6732632
    %vm440 = vcmp.gt.f32.partialorder %v432, 0.0
    %v441 = vsel %vm440, %v432, %v439
    %v442 = vmul.f32 %v441, 1.050701
    %v443 = vadd.f32 %v442, %v341
    %v444 = vld [vmem:[#allocation10] sm:$0xff]
    %v445 = vld [vmem:[#allocation10 + $0x8] sm:$0xff]
    %v446 = vld [vmem:[#allocation10 + $0x10] sm:$0xff]
    %v447 = vld [vmem:[#allocation10 + $0x18] sm:$0xff]
    %v448 = vld [vmem:[#allocation10 + $0x20] sm:$0xff]
    %v449 = vld [vmem:[#allocation10 + $0x28] sm:$0xff]
    %v450 = vld [vmem:[#allocation10 + $0x30] sm:$0xff]
    %v451 = vld [vmem:[#allocation10 + $0x38] sm:$0xff]
    %v452 = vld [vmem:[#allocation10 + $0x40] sm:$0xff]
    %v453 = vld [vmem:[#allocation10 + $0x48] sm:$0xff]
    %v454 = vld [vmem:[#allocation10 + $0x50] sm:$0xff]
    %v455 = vld [vmem:[#allocation10 + $0x58] sm:$0xff]
    %v456 = vld [vmem:[#allocation10 + $0x60] sm:$0xff]
    %v457 = vld [vmem:[#allocation10 + $0x68] sm:$0xff]
    %v458 = vld [vmem:[#allocation10 + $0x70] sm:$0xff]
    %v459 = vld [vmem:[#allocation10 + $0x78] sm:$0xff]
    %v460 = vld [vmem:[%s8] sm:$0x1]
    %v462 = vlaneseq
    %v463 = vshrl.u32 %v462, 7
    %v464 = vsub.s32 0, %v463
    %v465 = vrot.slane %v460, %v464
    %467 = vmatprep.subr.mxu0 0.0
    %468 = vmatpush1.msra.mxu0 %v459
    %469 = vmatprep.subr.mxu0 0.0
    %470 = vmatpush1.msra.mxu0 %v458
    %471 = vmatprep.subr.mxu0 0.0
    %472 = vmatpush1.msra.mxu0 %v457
    %473 = vmatprep.subr.mxu0 0.0
    %474 = vmatpush1.msra.mxu0 %v456
    %475 = vmatprep.subr.mxu0 0.0
    %476 = vmatpush1.msra.mxu0 %v455
    %477 = vmatprep.subr.mxu0 0.0
    %478 = vmatpush1.msra.mxu0 %v454
    %479 = vmatprep.subr.mxu0 0.0
    %480 = vmatpush1.msra.mxu0 %v453
    %481 = vmatprep.subr.mxu0 0.0
    %482 = vmatpush1.msra.mxu0 %v452
    %483 = vmatprep.subr.mxu0 0.0
    %484 = vmatpush1.msra.mxu0 %v451
    %485 = vmatprep.subr.mxu0 0.0
    %486 = vmatpush1.msra.mxu0 %v450
    %487 = vmatprep.subr.mxu0 0.0
    %488 = vmatpush1.msra.mxu0 %v449
    %489 = vmatprep.subr.mxu0 0.0
    %490 = vmatpush1.msra.mxu0 %v448
    %491 = vmatprep.subr.mxu0 0.0
    %492 = vmatpush1.msra.mxu0 %v447
    %493 = vmatprep.subr.mxu0 0.0
    %494 = vmatpush1.msra.mxu0 %v446
    %495 = vmatprep.subr.mxu0 0.0
    %496 = vmatpush1.msra.mxu0 %v445
    %497 = vmatprep.subr.mxu0 0.0
    %498 = vmatpush1.msra.mxu0 %v444
    %499 = vmatprep.subr.mxu0 0.0
    %500 = vmatpush2.msra.mxu0 0.0
    %501 = vmatprep.subr.mxu0 0.0
    %502 = vmatpush2.msra.mxu0 0.0
    %503 = vmatprep.subr.mxu0 0.0
    %504 = vmatpush2.msra.mxu0 0.0
    %505 = vmatprep.subr.mxu0 0.0
    %506 = vmatpush2.msra.mxu0 0.0
    %507 = vmatprep.subr.mxu0 0.0
    %508 = vmatpush2.msra.mxu0 0.0
    %509 = vmatprep.subr.mxu0 0.0
    %510 = vmatpush2.msra.mxu0 0.0
    %511 = vmatprep.subr.mxu0 0.0
    %512 = vmatpush2.msra.mxu0 0.0
    %513 = vmatprep.subr.mxu0 0.0
    %514 = vmatpush2.msra.mxu0 0.0
    %515 = vmatprep.subr.mxu0 0.0
    %516 = vmatpush2.msra.mxu0 0.0
    %517 = vmatprep.subr.mxu0 0.0
    %518 = vmatpush2.msra.mxu0 0.0
    %519 = vmatprep.subr.mxu0 0.0
    %520 = vmatpush2.msra.mxu0 0.0
    %521 = vmatprep.subr.mxu0 0.0
    %522 = vmatpush2.msra.mxu0 0.0
    %523 = vmatprep.subr.mxu0 0.0
    %524 = vmatpush2.msra.mxu0 0.0
    %525 = vmatprep.subr.mxu0 0.0
    %526 = vmatpush2.msra.mxu0 0.0
    %527 = vmatprep.subr.mxu0 0.0
    %528 = vmatpush2.msra.mxu0 0.0
    %529 = vmatprep.subr.mxu0 0.0
    %530 = vmatpush2.msra.mxu0 0.0
    %531 = vmatprep.mubr.f32.mxu0 0.0
    %532 = vmatmul.mubr.f32.gmra.mxu0 %v443
    %v533 = vpop.f32.mrf.mxu0
    %v534 = vadd.f32 %v465, %v533
    %v535 = vpop.f32.mrf.mxu0
    %536 = vdwg.mxu0
    %v537 = vmin.f32 %v534, 0.0
    %v538 = vmul.f32 %v537, 1.442695
    %v539 = vpow.pop %v538
    %v540 = vsub.f32 %v539, 1.0
    %v541 = vmul.f32 %v540, 1.6732632
    %vm542 = vcmp.gt.f32.partialorder %v534, 0.0
    %v543 = vsel %vm542, %v534, %v541
    %v544 = vmul.f32 %v543, 1.050701
    %v545 = vadd.f32 %v544, %v443
    %v546 = vld [vmem:[#allocation11] sm:$0xff]
    %v547 = vld [vmem:[#allocation11 + $0x8] sm:$0xff]
    %v548 = vld [vmem:[#allocation11 + $0x10] sm:$0xff]
    %v549 = vld [vmem:[#allocation11 + $0x18] sm:$0xff]
    %v550 = vld [vmem:[#allocation11 + $0x20] sm:$0xff]
    %v551 = vld [vmem:[#allocation11 + $0x28] sm:$0xff]
    %v552 = vld [vmem:[#allocation11 + $0x30] sm:$0xff]
    %v553 = vld [vmem:[#allocation11 + $0x38] sm:$0xff]
    %v554 = vld [vmem:[#allocation11 + $0x40] sm:$0xff]
    %v555 = vld [vmem:[#allocation11 + $0x48] sm:$0xff]
    %v556 = vld [vmem:[#allocation11 + $0x50] sm:$0xff]
    %v557 = vld [vmem:[#allocation11 + $0x58] sm:$0xff]
    %v558 = vld [vmem:[#allocation11 + $0x60] sm:$0xff]
    %v559 = vld [vmem:[#allocation11 + $0x68] sm:$0xff]
    %v560 = vld [vmem:[#allocation11 + $0x70] sm:$0xff]
    %v561 = vld [vmem:[#allocation11 + $0x78] sm:$0xff]
    %v562 = vld [vmem:[%s10] sm:$0x1]
    %v564 = vlaneseq
    %v565 = vshrl.u32 %v564, 7
    %v566 = vsub.s32 0, %v565
    %v567 = vrot.slane %v562, %v566
    %569 = vmatprep.subr.mxu0 0.0
    %570 = vmatpush1.msra.mxu0 %v561
    %571 = vmatprep.subr.mxu0 0.0
    %572 = vmatpush1.msra.mxu0 %v560
    %573 = vmatprep.subr.mxu0 0.0
    %574 = vmatpush1.msra.mxu0 %v559
    %575 = vmatprep.subr.mxu0 0.0
    %576 = vmatpush1.msra.mxu0 %v558
    %577 = vmatprep.subr.mxu0 0.0
    %578 = vmatpush1.msra.mxu0 %v557
    %579 = vmatprep.subr.mxu0 0.0
    %580 = vmatpush1.msra.mxu0 %v556
    %581 = vmatprep.subr.mxu0 0.0
    %582 = vmatpush1.msra.mxu0 %v555
    %583 = vmatprep.subr.mxu0 0.0
    %584 = vmatpush1.msra.mxu0 %v554
    %585 = vmatprep.subr.mxu0 0.0
    %586 = vmatpush1.msra.mxu0 %v553
    %587 = vmatprep.subr.mxu0 0.0
    %588 = vmatpush1.msra.mxu0 %v552
    %589 = vmatprep.subr.mxu0 0.0
    %590 = vmatpush1.msra.mxu0 %v551
    %591 = vmatprep.subr.mxu0 0.0
    %592 = vmatpush1.msra.mxu0 %v550
    %593 = vmatprep.subr.mxu0 0.0
    %594 = vmatpush1.msra.mxu0 %v549
    %595 = vmatprep.subr.mxu0 0.0
    %596 = vmatpush1.msra.mxu0 %v548
    %597 = vmatprep.subr.mxu0 0.0
    %598 = vmatpush1.msra.mxu0 %v547
    %599 = vmatprep.subr.mxu0 0.0
    %600 = vmatpush1.msra.mxu0 %v546
    %601 = vmatprep.subr.mxu0 0.0
    %602 = vmatpush2.msra.mxu0 0.0
    %603 = vmatprep.subr.mxu0 0.0
    %604 = vmatpush2.msra.mxu0 0.0
    %605 = vmatprep.subr.mxu0 0.0
    %606 = vmatpush2.msra.mxu0 0.0
    %607 = vmatprep.subr.mxu0 0.0
    %608 = vmatpush2.msra.mxu0 0.0
    %609 = vmatprep.subr.mxu0 0.0
    %610 = vmatpush2.msra.mxu0 0.0
    %611 = vmatprep.subr.mxu0 0.0
    %612 = vmatpush2.msra.mxu0 0.0
    %613 = vmatprep.subr.mxu0 0.0
    %614 = vmatpush2.msra.mxu0 0.0
    %615 = vmatprep.subr.mxu0 0.0
    %616 = vmatpush2.msra.mxu0 0.0
    %617 = vmatprep.subr.mxu0 0.0
    %618 = vmatpush2.msra.mxu0 0.0
    %619 = vmatprep.subr.mxu0 0.0
    %620 = vmatpush2.msra.mxu0 0.0
    %621 = vmatprep.subr.mxu0 0.0
    %622 = vmatpush2.msra.mxu0 0.0
    %623 = vmatprep.subr.mxu0 0.0
    %624 = vmatpush2.msra.mxu0 0.0
    %625 = vmatprep.subr.mxu0 0.0
    %626 = vmatpush2.msra.mxu0 0.0
    %627 = vmatprep.subr.mxu0 0.0
    %628 = vmatpush2.msra.mxu0 0.0
    %629 = vmatprep.subr.mxu0 0.0
    %630 = vmatpush2.msra.mxu0 0.0
    %631 = vmatprep.subr.mxu0 0.0
    %632 = vmatpush2.msra.mxu0 0.0
    %633 = vmatprep.mubr.f32.mxu0 0.0
    %634 = vmatmul.mubr.f32.gmra.mxu0 %v545
    %v635 = vpop.f32.mrf.mxu0
    %v636 = vadd.f32 %v567, %v635
    %v637 = vpop.f32.mrf.mxu0
    %638 = vdwg.mxu0
    %v639 = vmin.f32 %v636, 0.0
    %v640 = vmul.f32 %v639, 1.442695
    %v641 = vpow.pop %v640
    %v642 = vsub.f32 %v641, 1.0
    %v643 = vmul.f32 %v642, 1.6732632
    %vm644 = vcmp.gt.f32.partialorder %v636, 0.0
    %v645 = vsel %vm644, %v636, %v643
    %v646 = vmul.f32 %v645, 1.050701
    %v647 = vadd.f32 %v646, %v545
    %v648 = vld [vmem:[#allocation13] sm:$0xff]
    %v649 = vld [vmem:[#allocation13 + $0x8] sm:$0xff]
    %v650 = vld [vmem:[#allocation13 + $0x10] sm:$0xff]
    %v651 = vld [vmem:[#allocation13 + $0x18] sm:$0xff]
    %v652 = vld [vmem:[#allocation13 + $0x20] sm:$0xff]
    %v653 = vld [vmem:[#allocation13 + $0x28] sm:$0xff]
    %v654 = vld [vmem:[#allocation13 + $0x30] sm:$0xff]
    %v655 = vld [vmem:[#allocation13 + $0x38] sm:$0xff]
    %v656 = vld [vmem:[#allocation13 + $0x40] sm:$0xff]
    %v657 = vld [vmem:[#allocation13 + $0x48] sm:$0xff]
    %v658 = vld [vmem:[#allocation13 + $0x50] sm:$0xff]
    %v659 = vld [vmem:[#allocation13 + $0x58] sm:$0xff]
    %v660 = vld [vmem:[#allocation13 + $0x60] sm:$0xff]
    %v661 = vld [vmem:[#allocation13 + $0x68] sm:$0xff]
    %v662 = vld [vmem:[#allocation13 + $0x70] sm:$0xff]
    %v663 = vld [vmem:[#allocation13 + $0x78] sm:$0xff]
    %v664 = vld [vmem:[%s12] sm:$0x1]
    %v666 = vlaneseq
    %v667 = vshrl.u32 %v666, 7
    %v668 = vsub.s32 0, %v667
    %v669 = vrot.slane %v664, %v668
    %671 = vmatprep.subr.mxu0 0.0
    %672 = vmatpush1.msra.mxu0 %v663
    %673 = vmatprep.subr.mxu0 0.0
    %674 = vmatpush1.msra.mxu0 %v662
    %675 = vmatprep.subr.mxu0 0.0
    %676 = vmatpush1.msra.mxu0 %v661
    %677 = vmatprep.subr.mxu0 0.0
    %678 = vmatpush1.msra.mxu0 %v660
    %679 = vmatprep.subr.mxu0 0.0
    %680 = vmatpush1.msra.mxu0 %v659
    %681 = vmatprep.subr.mxu0 0.0
    %682 = vmatpush1.msra.mxu0 %v658
    %683 = vmatprep.subr.mxu0 0.0
    %684 = vmatpush1.msra.mxu0 %v657
    %685 = vmatprep.subr.mxu0 0.0
    %686 = vmatpush1.msra.mxu0 %v656
    %687 = vmatprep.subr.mxu0 0.0
    %688 = vmatpush1.msra.mxu0 %v655
    %689 = vmatprep.subr.mxu0 0.0
    %690 = vmatpush1.msra.mxu0 %v654
    %691 = vmatprep.subr.mxu0 0.0
    %692 = vmatpush1.msra.mxu0 %v653
    %693 = vmatprep.subr.mxu0 0.0
    %694 = vmatpush1.msra.mxu0 %v652
    %695 = vmatprep.subr.mxu0 0.0
    %696 = vmatpush1.msra.mxu0 %v651
    %697 = vmatprep.subr.mxu0 0.0
    %698 = vmatpush1.msra.mxu0 %v650
    %699 = vmatprep.subr.mxu0 0.0
    %700 = vmatpush1.msra.mxu0 %v649
    %701 = vmatprep.subr.mxu0 0.0
    %702 = vmatpush1.msra.mxu0 %v648
    %703 = vmatprep.subr.mxu0 0.0
    %704 = vmatpush2.msra.mxu0 0.0
    %705 = vmatprep.subr.mxu0 0.0
    %706 = vmatpush2.msra.mxu0 0.0
    %707 = vmatprep.subr.mxu0 0.0
    %708 = vmatpush2.msra.mxu0 0.0
    %709 = vmatprep.subr.mxu0 0.0
    %710 = vmatpush2.msra.mxu0 0.0
    %711 = vmatprep.subr.mxu0 0.0
    %712 = vmatpush2.msra.mxu0 0.0
    %713 = vmatprep.subr.mxu0 0.0
    %714 = vmatpush2.msra.mxu0 0.0
    %715 = vmatprep.subr.mxu0 0.0
    %716 = vmatpush2.msra.mxu0 0.0
    %717 = vmatprep.subr.mxu0 0.0
    %718 = vmatpush2.msra.mxu0 0.0
    %719 = vmatprep.subr.mxu0 0.0
    %720 = vmatpush2.msra.mxu0 0.0
    %721 = vmatprep.subr.mxu0 0.0
    %722 = vmatpush2.msra.mxu0 0.0
    %723 = vmatprep.subr.mxu0 0.0
    %724 = vmatpush2.msra.mxu0 0.0
    %725 = vmatprep.subr.mxu0 0.0
    %726 = vmatpush2.msra.mxu0 0.0
    %727 = vmatprep.subr.mxu0 0.0
    %728 = vmatpush2.msra.mxu0 0.0
    %729 = vmatprep.subr.mxu0 0.0
    %730 = vmatpush2.msra.mxu0 0.0
    %731 = vmatprep.subr.mxu0 0.0
    %732 = vmatpush2.msra.mxu0 0.0
    %733 = vmatprep.subr.mxu0 0.0
    %734 = vmatpush2.msra.mxu0 0.0
    %735 = vmatprep.mubr.f32.mxu0 0.0
    %736 = vmatmul.mubr.f32.gmra.mxu0 %v647
    %v737 = vpop.f32.mrf.mxu0
    %v738 = vadd.f32 %v669, %v737
    %v739 = vpop.f32.mrf.mxu0
    %740 = vdwg.mxu0
    %741 = vst [vmem:[#allocation14] sm:$0xff] %v738
    // Predicated region
    $region82: #{tpu_custom_call.1} parent=1 // pred_check
      _
    $region83: #{tpu_custom_call.1} parent=1 // pred_check_branch
      %743 = sbr.rel (0) target = $region85
    $region84: #{tpu_custom_call.1} parent=1 // pred_region
      %s745 = ssub.s32 128, 128
      %746 = vsyncadd [#allocation4], %s745
      %s748 = sshll.u32 [#allocation14], 4
      %s749 = int_to_ptr.vmem [resolvable:$true] %s748
      %751 = dma.vmem_to_hbm [thread:$0]  %s749, 128, %s13, [#allocation4]
    $region85: #{tpu_custom_call.1} parent=1 // pred_fallthru
      _
    // Predicated region
    $region86: #{tpu_custom_call.1} parent=1 // pred_check
      _
    $region87: #{tpu_custom_call.1} parent=1 // pred_check_branch
      %753 = sbr.rel (0) target = $region89
    $region88: #{tpu_custom_call.1} parent=1 // pred_region
      %754 = dma.done [#allocation4], 128
    $region89: #{tpu_custom_call.1} parent=1 // pred_fallthru
      _
    %755 = vsyncpa [#allocation3], 1
    %756 = vsyncpa [#allocation6], 1
    %757 = vsyncpa [#allocation9], 1
    %758 = vsyncpa [#allocation12], 1
    %759 = vsyncpa [#allocation4], 1

// kernel: tpu_custom_call.1
$region0: #{tpu_custom_call.1}
  #allocation0 [shape = 'u32[]', space=smem, size = 0x4, offset = 0x4, fixed_abs, tag = 'smem constant byte address 0x4 - core index']
  #allocation1 [shape = 'u32[144,128]{1,0:T(1,128)}', space=vmem, size = 0x12000, scoped, tag = 'internal scratch']
  %s0 = inlined_call_operand.hbm [shape: f32[8,128], index: 0, kind: input, shape index: {}]
  %s1 = inlined_call_operand.hbm [shape: f32[128,128], index: 1, kind: input, shape index: {}]
  %s2 = inlined_call_operand.vmem [shape: f32[1,128], index: 2, kind: input, shape index: {}]
  %s3 = inlined_call_operand.hbm [shape: f32[128,128], index: 3, kind: input, shape index: {}]
  %s4 = inlined_call_operand.vmem [shape: f32[1,128], index: 4, kind: input, shape index: {}]
  %s5 = inlined_call_operand.hbm [shape: f32[128,128], index: 5, kind: input, shape index: {}]
  %s6 = inlined_call_operand.vmem [shape: f32[1,128], index: 6, kind: input, shape index: {}]
  %s7 = inlined_call_operand.hbm [shape: f32[128,128], index: 7, kind: input, shape index: {}]
  %s8 = inlined_call_operand.vmem [shape: f32[1,128], index: 8, kind: input, shape index: {}]
  %s9 = inlined_call_operand.hbm [shape: f32[128,128], index: 9, kind: input, shape index: {}]
  %s10 = inlined_call_operand.vmem [shape: f32[1,128], index: 10, kind: input, shape index: {}]
  %s11 = inlined_call_operand.hbm [shape: f32[128,128], index: 11, kind: input, shape index: {}]
  %s12 = inlined_call_operand.vmem [shape: f32[1,128], index: 12, kind: input, shape index: {}]
  %s13 = inlined_call_operand.hbm [shape: f32[8,128], index: 13, kind: output, shape index: {}]
  %s14 = sld [smem:[#allocation0]]
  $region90: #{tpu_custom_call.1} parent=0
    _
  %s16 = ssub.s32 1, %s14
  %s17 = scalar_select 0, %s16, %s14
  $region1: #{tpu_custom_call.1} parent=0
    #allocation2 [shape = 'u8[4096]{0}', space=vmem, size = 0x1000, scoped, tag = 'input window, operand 0, single buffered']
    #allocation3 [shape = 's32[1]{0}', space=sflag, size = 0x4, scoped, tag = 'scoped memory for tpu_custom_call.1']
    #allocation4 [shape = 's32[1]{0}', space=sflag, size = 0x4, scoped, tag = 'scoped memory for tpu_custom_call.1']
    #allocation5 [shape = 'u8[65536]{0}', space=vmem, size = 0x10000, scoped, tag = 'input window, operand 1, single buffered']
    #allocation6 [shape = 's32[1]{0}', space=sflag, size = 0x4, scoped, tag = 'scoped memory for tpu_custom_call.1']
    #allocation7 [shape = 'u8[65536]{0}', space=vmem, size = 0x10000, scoped, tag = 'input window, operand 3, single buffered']
    #allocation8 [shape = 'u8[65536]{0}', space=vmem, size = 0x10000, scoped, tag = 'input window, operand 5, single buffered']
    #allocation9 [shape = 's32[1]{0}', space=sflag, size = 0x4, scoped, tag = 'scoped memory for tpu_custom_call.1']
    #allocation10 [shape = 'u8[65536]{0}', space=vmem, size = 0x10000, scoped, tag = 'input window, operand 7, single buffered']
    #allocation11 [shape = 'u8[65536]{0}', space=vmem, size = 0x10000, scoped, tag = 'input window, operand 9, single buffered']
    #allocation12 [shape = 's32[1]{0}', space=sflag, size = 0x4, scoped, tag = 'scoped memory for tpu_custom_call.1']
    #allocation13 [shape = 'u8[65536]{0}', space=vmem, size = 0x10000, scoped, tag = 'input window, operand 11, single buffered']
    #allocation14 [shape = 'u8[4096]{0}', space=vmem, size = 0x1000, scoped, tag = 'output window, operand 0, single buffered']
    %18 = vsyncpa [#allocation3], 0
    %19 = vsyncpa [#allocation6], 0
    %20 = vsyncpa [#allocation9], 0
    %21 = vsyncpa [#allocation12], 0
    %22 = vsyncpa [#allocation4], 0
    // Predicated region
    $region2: #{tpu_custom_call.1} parent=1 // pred_check
      _
    $region3: #{tpu_custom_call.1} parent=1 // pred_check_branch
      %24 = sbr.rel (0) target = $region5
    $region4: #{tpu_custom_call.1} parent=1 // pred_region
      %s26 = ssub.s32 128, 128
      %27 = vsyncadd [#allocation3], %s26
      %s29 = sshll.u32 [#allocation2], 4
      %s30 = int_to_ptr.vmem [resolvable:$true] %s29
      %32 = dma.hbm_to_vmem [thread:$0]  %s0, 128, %s30, [#allocation3]
    $region5: #{tpu_custom_call.1} parent=1 // pred_fallthru
      _
    // Predicated region
    $region6: #{tpu_custom_call.1} parent=1 // pred_check
      _
    $region7: #{tpu_custom_call.1} parent=1 // pred_check_branch
      %34 = sbr.rel (0) target = $region9
    $region8: #{tpu_custom_call.1} parent=1 // pred_region
      %s36 = ssub.s32 2048, 2048
      %37 = vsyncadd [#allocation6], %s36
      %s38 = sshll.u32 [#allocation5], 4
      %s39 = int_to_ptr.vmem [resolvable:$true] %s38
      %44 = dma.hbm_to_vmem [thread:$0]  %s1, 2048, %s39, [#allocation6], 128, 128, 8
    $region9: #{tpu_custom_call.1} parent=1 // pred_fallthru
      _
    // Predicated region
    $region10: #{tpu_custom_call.1} parent=1 // pred_check
      _
    $region11: #{tpu_custom_call.1} parent=1 // pred_check_branch
      %46 = sbr.rel (0) target = $region13
    $region12: #{tpu_custom_call.1} parent=1 // pred_region
      _
    $region13: #{tpu_custom_call.1} parent=1 // pred_fallthru
      _
    // Predicated region
    $region14: #{tpu_custom_call.1} parent=1 // pred_check
      _
    $region15: #{tpu_custom_call.1} parent=1 // pred_check_branch
      %48 = sbr.rel (0) target = $region17
    $region16: #{tpu_custom_call.1} parent=1 // pred_region
      %s50 = ssub.s32 2048, 2048
      %51 = vsyncadd [#allocation6], %s50
      %s52 = sshll.u32 [#allocation7], 4
      %s53 = int_to_ptr.vmem [resolvable:$true] %s52
      %58 = dma.hbm_to_vmem [thread:$0]  %s3, 2048, %s53, [#allocation6], 128, 128, 8
    $region17: #{tpu_custom_call.1} parent=1 // pred_fallthru
      _
    // Predicated region
    $region18: #{tpu_custom_call.1} parent=1 // pred_check
      _
    $region19: #{tpu_custom_call.1} parent=1 // pred_check_branch
      %60 = sbr.rel (0) target = $region21
    $region20: #{tpu_custom_call.1} parent=1 // pred_region
      _
    $region21: #{tpu_custom_call.1} parent=1 // pred_fallthru
      _
    // Predicated region
    $region22: #{tpu_custom_call.1} parent=1 // pred_check
      _
    $region23: #{tpu_custom_call.1} parent=1 // pred_check_branch
      %62 = sbr.rel (0) target = $region25
    $region24: #{tpu_custom_call.1} parent=1 // pred_region
      %s64 = ssub.s32 2048, 2048
      %65 = vsyncadd [#allocation9], %s64
      %s66 = sshll.u32 [#allocation8], 4
      %s67 = int_to_ptr.vmem [resolvable:$true] %s66
      %72 = dma.hbm_to_vmem [thread:$0]  %s5, 2048, %s67, [#allocation9], 128, 128, 8
    $region25: #{tpu_custom_call.1} parent=1 // pred_fallthru
      _
    // Predicated region
    $region26: #{tpu_custom_call.1} parent=1 // pred_check
      _
    $region27: #{tpu_custom_call.1} parent=1 // pred_check_branch
      %74 = sbr.rel (0) target = $region29
    $region28: #{tpu_custom_call.1} parent=1 // pred_region
      _
    $region29: #{tpu_custom_call.1} parent=1 // pred_fallthru
      _
    // Predicated region
    $region30: #{tpu_custom_call.1} parent=1 // pred_check
      _
    $region31: #{tpu_custom_call.1} parent=1 // pred_check_branch
      %76 = sbr.rel (0) target = $region33
    $region32: #{tpu_custom_call.1} parent=1 // pred_region
      %s78 = ssub.s32 2048, 2048
      %79 = vsyncadd [#allocation9], %s78
      %s80 = sshll.u32 [#allocation10], 4
      %s81 = int_to_ptr.vmem [resolvable:$true] %s80
      %86 = dma.hbm_to_vmem [thread:$0]  %s7, 2048, %s81, [#allocation9], 128, 128, 8
    $region33: #{tpu_custom_call.1} parent=1 // pred_fallthru
      _
    // Predicated region
    $region34: #{tpu_custom_call.1} parent=1 // pred_check
      _
    $region35: #{tpu_custom_call.1} parent=1 // pred_check_branch
      %88 = sbr.rel (0) target = $region37
    $region36: #{tpu_custom_call.1} parent=1 // pred_region
      _
    $region37: #{tpu_custom_call.1} parent=1 // pred_fallthru
      _
    // Predicated region
    $region38: #{tpu_custom_call.1} parent=1 // pred_check
      _
    $region39: #{tpu_custom_call.1} parent=1 // pred_check_branch
      %90 = sbr.rel (0) target = $region41
    $region40: #{tpu_custom_call.1} parent=1 // pred_region
      %s92 = ssub.s32 2048, 2048
      %93 = vsyncadd [#allocation12], %s92
      %s94 = sshll.u32 [#allocation11], 4
      %s95 = int_to_ptr.vmem [resolvable:$true] %s94
      %100 = dma.hbm_to_vmem [thread:$0]  %s9, 2048, %s95, [#allocation12], 128, 128, 8
    $region41: #{tpu_custom_call.1} parent=1 // pred_fallthru
      _
    // Predicated region
    $region42: #{tpu_custom_call.1} parent=1 // pred_check
      _
    $region43: #{tpu_custom_call.1} parent=1 // pred_check_branch
      %102 = sbr.rel (0) target = $region45
    $region44: #{tpu_custom_call.1} parent=1 // pred_region
      _
    $region45: #{tpu_custom_call.1} parent=1 // pred_fallthru
      _
    // Predicated region
    $region46: #{tpu_custom_call.1} parent=1 // pred_check
      _
    $region47: #{tpu_custom_call.1} parent=1 // pred_check_branch
      %104 = sbr.rel (0) target = $region49
    $region48: #{tpu_custom_call.1} parent=1 // pred_region
      %s106 = ssub.s32 2048, 2048
      %107 = vsyncadd [#allocation12], %s106
      %s108 = sshll.u32 [#allocation13], 4
      %s109 = int_to_ptr.vmem [resolvable:$true] %s108
      %114 = dma.hbm_to_vmem [thread:$0]  %s11, 2048, %s109, [#allocation12], 128, 128, 8
    $region49: #{tpu_custom_call.1} parent=1 // pred_fallthru
      _
    // Predicated region
    $region50: #{tpu_custom_call.1} parent=1 // pred_check
      _
    $region51: #{tpu_custom_call.1} parent=1 // pred_check_branch
      %116 = sbr.rel (0) target = $region53
    $region52: #{tpu_custom_call.1} parent=1 // pred_region
      _
    $region53: #{tpu_custom_call.1} parent=1 // pred_fallthru
      _
    // Predicated region
    $region54: #{tpu_custom_call.1} parent=1 // pred_check
      _
    $region55: #{tpu_custom_call.1} parent=1 // pred_check_branch
      %118 = sbr.rel (0) target = $region57
    $region56: #{tpu_custom_call.1} parent=1 // pred_region
      %119 = dma.done [#allocation3], 128
    $region57: #{tpu_custom_call.1} parent=1 // pred_fallthru
      _
    // Predicated region
    $region58: #{tpu_custom_call.1} parent=1 // pred_check
      _
    $region59: #{tpu_custom_call.1} parent=1 // pred_check_branch
      %121 = sbr.rel (0) target = $region61
    $region60: #{tpu_custom_call.1} parent=1 // pred_region
      %122 = dma.done [#allocation6], 2048
    $region61: #{tpu_custom_call.1} parent=1 // pred_fallthru
      _
    // Predicated region
    $region62: #{tpu_custom_call.1} parent=1 // pred_check
      _
    $region63: #{tpu_custom_call.1} parent=1 // pred_check_branch
      %124 = sbr.rel (0) target = $region65
    $region64: #{tpu_custom_call.1} parent=1 // pred_region
      %125 = dma.done [#allocation6], 2048
    $region65: #{tpu_custom_call.1} parent=1 // pred_fallthru
      _
    // Predicated region
    $region66: #{tpu_custom_call.1} parent=1 // pred_check
      _
    $region67: #{tpu_custom_call.1} parent=1 // pred_check_branch
      %127 = sbr.rel (0) target = $region69
    $region68: #{tpu_custom_call.1} parent=1 // pred_region
      %128 = dma.done [#allocation9], 2048
    $region69: #{tpu_custom_call.1} parent=1 // pred_fallthru
      _
    // Predicated region
    $region70: #{tpu_custom_call.1} parent=1 // pred_check
      _
    $region71: #{tpu_custom_call.1} parent=1 // pred_check_branch
      %130 = sbr.rel (0) target = $region73
    $region72: #{tpu_custom_call.1} parent=1 // pred_region
      %131 = dma.done [#allocation9], 2048
    $region73: #{tpu_custom_call.1} parent=1 // pred_fallthru
      _
    // Predicated region
    $region74: #{tpu_custom_call.1} parent=1 // pred_check
      _
    $region75: #{tpu_custom_call.1} parent=1 // pred_check_branch
      %133 = sbr.rel (0) target = $region77
    $region76: #{tpu_custom_call.1} parent=1 // pred_region
      %134 = dma.done [#allocation12], 2048
    $region77: #{tpu_custom_call.1} parent=1 // pred_fallthru
      _
    // Predicated region
    $region78: #{tpu_custom_call.1} parent=1 // pred_check
      _
    $region79: #{tpu_custom_call.1} parent=1 // pred_check_branch
      %136 = sbr.rel (0) target = $region81
    $region80: #{tpu_custom_call.1} parent=1 // pred_region
      %137 = dma.done [#allocation12], 2048
    $region81: #{tpu_custom_call.1} parent=1 // pred_fallthru
      _
    %v138 = vld [vmem:[#allocation2] sm:$0xff]
    %v139 = vld [vmem:[#allocation5] sm:$0xff]
    %v140 = vld [vmem:[#allocation5 + $0x8] sm:$0xff]
    %v141 = vld [vmem:[#allocation5 + $0x10] sm:$0xff]
    %v142 = vld [vmem:[#allocation5 + $0x18] sm:$0xff]
    %v143 = vld [vmem:[#allocation5 + $0x20] sm:$0xff]
    %v144 = vld [vmem:[#allocation5 + $0x28] sm:$0xff]
    %v145 = vld [vmem:[#allocation5 + $0x30] sm:$0xff]
    %v146 = vld [vmem:[#allocation5 + $0x38] sm:$0xff]
    %v147 = vld [vmem:[#allocation5 + $0x40] sm:$0xff]
    %v148 = vld [vmem:[#allocation5 + $0x48] sm:$0xff]
    %v149 = vld [vmem:[#allocation5 + $0x50] sm:$0xff]
    %v150 = vld [vmem:[#allocation5 + $0x58] sm:$0xff]
    %v151 = vld [vmem:[#allocation5 + $0x60] sm:$0xff]
    %v152 = vld [vmem:[#allocation5 + $0x68] sm:$0xff]
    %v153 = vld [vmem:[#allocation5 + $0x70] sm:$0xff]
    %v154 = vld [vmem:[#allocation5 + $0x78] sm:$0xff]
    %v155 = vld [vmem:[%s2] sm:$0x1]
    %v157 = vlaneseq
    %v158 = vshrl.u32 %v157, 7
    %v159 = vsub.s32 0, %v158
    %v160 = vrot.slane %v155, %v159
    %162 = vmatprep.subr.mxu0 0.0
    %163 = vmatpush1.msra.mxu0 %v154
    %164 = vmatprep.subr.mxu0 0.0
    %165 = vmatpush1.msra.mxu0 %v153
    %166 = vmatprep.subr.mxu0 0.0
    %167 = vmatpush1.msra.mxu0 %v152
    %168 = vmatprep.subr.mxu0 0.0
    %169 = vmatpush1.msra.mxu0 %v151
    %170 = vmatprep.subr.mxu0 0.0
    %171 = vmatpush1.msra.mxu0 %v150
    %172 = vmatprep.subr.mxu0 0.0
    %173 = vmatpush1.msra.mxu0 %v149
    %174 = vmatprep.subr.mxu0 0.0
    %175 = vmatpush1.msra.mxu0 %v148
    %176 = vmatprep.subr.mxu0 0.0
    %177 = vmatpush1.msra.mxu0 %v147
    %178 = vmatprep.subr.mxu0 0.0
    %179 = vmatpush1.msra.mxu0 %v146
    %180 = vmatprep.subr.mxu0 0.0
    %181 = vmatpush1.msra.mxu0 %v145
    %182 = vmatprep.subr.mxu0 0.0
    %183 = vmatpush1.msra.mxu0 %v144
    %184 = vmatprep.subr.mxu0 0.0
    %185 = vmatpush1.msra.mxu0 %v143
    %186 = vmatprep.subr.mxu0 0.0
    %187 = vmatpush1.msra.mxu0 %v142
    %188 = vmatprep.subr.mxu0 0.0
    %189 = vmatpush1.msra.mxu0 %v141
    %190 = vmatprep.subr.mxu0 0.0
    %191 = vmatpush1.msra.mxu0 %v140
    %192 = vmatprep.subr.mxu0 0.0
    %193 = vmatpush1.msra.mxu0 %v139
    %194 = vmatprep.subr.mxu0 0.0
    %195 = vmatpush2.msra.mxu0 0.0
    %196 = vmatprep.subr.mxu0 0.0
    %197 = vmatpush2.msra.mxu0 0.0
    %198 = vmatprep.subr.mxu0 0.0
    %199 = vmatpush2.msra.mxu0 0.0
    %200 = vmatprep.subr.mxu0 0.0
    %201 = vmatpush2.msra.mxu0 0.0
    %202 = vmatprep.subr.mxu0 0.0
    %203 = vmatpush2.msra.mxu0 0.0
    %204 = vmatprep.subr.mxu0 0.0
    %205 = vmatpush2.msra.mxu0 0.0
    %206 = vmatprep.subr.mxu0 0.0
    %207 = vmatpush2.msra.mxu0 0.0
    %208 = vmatprep.subr.mxu0 0.0
    %209 = vmatpush2.msra.mxu0 0.0
    %210 = vmatprep.subr.mxu0 0.0
    %211 = vmatpush2.msra.mxu0 0.0
    %212 = vmatprep.subr.mxu0 0.0
    %213 = vmatpush2.msra.mxu0 0.0
    %214 = vmatprep.subr.mxu0 0.0
    %215 = vmatpush2.msra.mxu0 0.0
    %216 = vmatprep.subr.mxu0 0.0
    %217 = vmatpush2.msra.mxu0 0.0
    %218 = vmatprep.subr.mxu0 0.0
    %219 = vmatpush2.msra.mxu0 0.0
    %220 = vmatprep.subr.mxu0 0.0
    %221 = vmatpush2.msra.mxu0 0.0
    %222 = vmatprep.subr.mxu0 0.0
    %223 = vmatpush2.msra.mxu0 0.0
    %224 = vmatprep.subr.mxu0 0.0
    %225 = vmatpush2.msra.mxu0 0.0
    %226 = vmatprep.mubr.f32.mxu0 0.0
    %227 = vmatmul.mubr.f32.gmra.mxu0 %v138
    %v228 = vpop.f32.mrf.mxu0
    %v229 = vadd.f32 %v160, %v228
    %v230 = vpop.f32.mrf.mxu0
    %231 = vdwg.mxu0
    %v232 = vmin.f32 %v229, 0.0
    %v233 = vmul.f32 %v232, 1.442695
    %v234 = vpow.pop %v233
    %v235 = vsub.f32 %v234, 1.0
    %v236 = vmul.f32 %v235, 1.6732632
    %vm237 = vcmp.gt.f32.partialorder %v229, 0.0
    %v238 = vsel %vm237, %v229, %v236
    %v239 = vmul.f32 %v238, 1.050701
    %v240 = vld [vmem:[#allocation7] sm:$0xff]
    %v241 = vld [vmem:[#allocation7 + $0x8] sm:$0xff]
    %v242 = vld [vmem:[#allocation7 + $0x10] sm:$0xff]
    %v243 = vld [vmem:[#allocation7 + $0x18] sm:$0xff]
    %v244 = vld [vmem:[#allocation7 + $0x20] sm:$0xff]
    %v245 = vld [vmem:[#allocation7 + $0x28] sm:$0xff]
    %v246 = vld [vmem:[#allocation7 + $0x30] sm:$0xff]
    %v247 = vld [vmem:[#allocation7 + $0x38] sm:$0xff]
    %v248 = vld [vmem:[#allocation7 + $0x40] sm:$0xff]
    %v249 = vld [vmem:[#allocation7 + $0x48] sm:$0xff]
    %v250 = vld [vmem:[#allocation7 + $0x50] sm:$0xff]
    %v251 = vld [vmem:[#allocation7 + $0x58] sm:$0xff]
    %v252 = vld [vmem:[#allocation7 + $0x60] sm:$0xff]
    %v253 = vld [vmem:[#allocation7 + $0x68] sm:$0xff]
    %v254 = vld [vmem:[#allocation7 + $0x70] sm:$0xff]
    %v255 = vld [vmem:[#allocation7 + $0x78] sm:$0xff]
    %v256 = vld [vmem:[%s4] sm:$0x1]
    %v258 = vlaneseq
    %v259 = vshrl.u32 %v258, 7
    %v260 = vsub.s32 0, %v259
    %v261 = vrot.slane %v256, %v260
    %263 = vmatprep.subr.mxu0 0.0
    %264 = vmatpush1.msra.mxu0 %v255
    %265 = vmatprep.subr.mxu0 0.0
    %266 = vmatpush1.msra.mxu0 %v254
    %267 = vmatprep.subr.mxu0 0.0
    %268 = vmatpush1.msra.mxu0 %v253
    %269 = vmatprep.subr.mxu0 0.0
    %270 = vmatpush1.msra.mxu0 %v252
    %271 = vmatprep.subr.mxu0 0.0
    %272 = vmatpush1.msra.mxu0 %v251
    %273 = vmatprep.subr.mxu0 0.0
    %274 = vmatpush1.msra.mxu0 %v250
    %275 = vmatprep.subr.mxu0 0.0
    %276 = vmatpush1.msra.mxu0 %v249
    %277 = vmatprep.subr.mxu0 0.0
    %278 = vmatpush1.msra.mxu0 %v248
    %279 = vmatprep.subr.mxu0 0.0
    %280 = vmatpush1.msra.mxu0 %v247
    %281 = vmatprep.subr.mxu0 0.0
    %282 = vmatpush1.msra.mxu0 %v246
    %283 = vmatprep.subr.mxu0 0.0
    %284 = vmatpush1.msra.mxu0 %v245
    %285 = vmatprep.subr.mxu0 0.0
    %286 = vmatpush1.msra.mxu0 %v244
    %287 = vmatprep.subr.mxu0 0.0
    %288 = vmatpush1.msra.mxu0 %v243
    %289 = vmatprep.subr.mxu0 0.0
    %290 = vmatpush1.msra.mxu0 %v242
    %291 = vmatprep.subr.mxu0 0.0
    %292 = vmatpush1.msra.mxu0 %v241
    %293 = vmatprep.subr.mxu0 0.0
    %294 = vmatpush1.msra.mxu0 %v240
    %295 = vmatprep.subr.mxu0 0.0
    %296 = vmatpush2.msra.mxu0 0.0
    %297 = vmatprep.subr.mxu0 0.0
    %298 = vmatpush2.msra.mxu0 0.0
    %299 = vmatprep.subr.mxu0 0.0
    %300 = vmatpush2.msra.mxu0 0.0
    %301 = vmatprep.subr.mxu0 0.0
    %302 = vmatpush2.msra.mxu0 0.0
    %303 = vmatprep.subr.mxu0 0.0
    %304 = vmatpush2.msra.mxu0 0.0
    %305 = vmatprep.subr.mxu0 0.0
    %306 = vmatpush2.msra.mxu0 0.0
    %307 = vmatprep.subr.mxu0 0.0
    %308 = vmatpush2.msra.mxu0 0.0
    %309 = vmatprep.subr.mxu0 0.0
    %310 = vmatpush2.msra.mxu0 0.0
    %311 = vmatprep.subr.mxu0 0.0
    %312 = vmatpush2.msra.mxu0 0.0
    %313 = vmatprep.subr.mxu0 0.0
    %314 = vmatpush2.msra.mxu0 0.0
    %315 = vmatprep.subr.mxu0 0.0
    %316 = vmatpush2.msra.mxu0 0.0
    %317 = vmatprep.subr.mxu0 0.0
    %318 = vmatpush2.msra.mxu0 0.0
    %319 = vmatprep.subr.mxu0 0.0
    %320 = vmatpush2.msra.mxu0 0.0
    %321 = vmatprep.subr.mxu0 0.0
    %322 = vmatpush2.msra.mxu0 0.0
    %323 = vmatprep.subr.mxu0 0.0
    %324 = vmatpush2.msra.mxu0 0.0
    %325 = vmatprep.subr.mxu0 0.0
    %326 = vmatpush2.msra.mxu0 0.0
    %327 = vmatprep.mubr.f32.mxu0 0.0
    %328 = vmatmul.mubr.f32.gmra.mxu0 %v239
    %v329 = vpop.f32.mrf.mxu0
    %v330 = vadd.f32 %v261, %v329
    %v331 = vpop.f32.mrf.mxu0
    %332 = vdwg.mxu0
    %v333 = vmin.f32 %v330, 0.0
    %v334 = vmul.f32 %v333, 1.442695
    %v335 = vpow.pop %v334
    %v336 = vsub.f32 %v335, 1.0
    %v337 = vmul.f32 %v336, 1.6732632
    %vm338 = vcmp.gt.f32.partialorder %v330, 0.0
    %v339 = vsel %vm338, %v330, %v337
    %v340 = vmul.f32 %v339, 1.050701
    %v341 = vadd.f32 %v340, %v239
    %v342 = vld [vmem:[#allocation8] sm:$0xff]
    %v343 = vld [vmem:[#allocation8 + $0x8] sm:$0xff]
    %v344 = vld [vmem:[#allocation8 + $0x10] sm:$0xff]
    %v345 = vld [vmem:[#allocation8 + $0x18] sm:$0xff]
    %v346 = vld [vmem:[#allocation8 + $0x20] sm:$0xff]
    %v347 = vld [vmem:[#allocation8 + $0x28] sm:$0xff]
    %v348 = vld [vmem:[#allocation8 + $0x30] sm:$0xff]
    %v349 = vld [vmem:[#allocation8 + $0x38] sm:$0xff]
    %v350 = vld [vmem:[#allocation8 + $0x40] sm:$0xff]
    %v351 = vld [vmem:[#allocation8 + $0x48] sm:$0xff]
    %v352 = vld [vmem:[#allocation8 + $0x50] sm:$0xff]
    %v353 = vld [vmem:[#allocation8 + $0x58] sm:$0xff]
    %v354 = vld [vmem:[#allocation8 + $0x60] sm:$0xff]
    %v355 = vld [vmem:[#allocation8 + $0x68] sm:$0xff]
    %v356 = vld [vmem:[#allocation8 + $0x70] sm:$0xff]
    %v357 = vld [vmem:[#allocation8 + $0x78] sm:$0xff]
    %v358 = vld [vmem:[%s6] sm:$0x1]
    %v360 = vlaneseq
    %v361 = vshrl.u32 %v360, 7
    %v362 = vsub.s32 0, %v361
    %v363 = vrot.slane %v358, %v362
    %365 = vmatprep.subr.mxu0 0.0
    %366 = vmatpush1.msra.mxu0 %v357
    %367 = vmatprep.subr.mxu0 0.0
    %368 = vmatpush1.msra.mxu0 %v356
    %369 = vmatprep.subr.mxu0 0.0
    %370 = vmatpush1.msra.mxu0 %v355
    %371 = vmatprep.subr.mxu0 0.0
    %372 = vmatpush1.msra.mxu0 %v354
    %373 = vmatprep.subr.mxu0 0.0
    %374 = vmatpush1.msra.mxu0 %v353
    %375 = vmatprep.subr.mxu0 0.0
    %376 = vmatpush1.msra.mxu0 %v352
    %377 = vmatprep.subr.mxu0 0.0
    %378 = vmatpush1.msra.mxu0 %v351
    %379 = vmatprep.subr.mxu0 0.0
    %380 = vmatpush1.msra.mxu0 %v350
    %381 = vmatprep.subr.mxu0 0.0
    %382 = vmatpush1.msra.mxu0 %v349
    %383 = vmatprep.subr.mxu0 0.0
    %384 = vmatpush1.msra.mxu0 %v348
    %385 = vmatprep.subr.mxu0 0.0
    %386 = vmatpush1.msra.mxu0 %v347
    %387 = vmatprep.subr.mxu0 0.0
    %388 = vmatpush1.msra.mxu0 %v346
    %389 = vmatprep.subr.mxu0 0.0
    %390 = vmatpush1.msra.mxu0 %v345
    %391 = vmatprep.subr.mxu0 0.0
    %392 = vmatpush1.msra.mxu0 %v344
    %393 = vmatprep.subr.mxu0 0.0
    %394 = vmatpush1.msra.mxu0 %v343
    %395 = vmatprep.subr.mxu0 0.0
    %396 = vmatpush1.msra.mxu0 %v342
    %397 = vmatprep.subr.mxu0 0.0
    %398 = vmatpush2.msra.mxu0 0.0
    %399 = vmatprep.subr.mxu0 0.0
    %400 = vmatpush2.msra.mxu0 0.0
    %401 = vmatprep.subr.mxu0 0.0
    %402 = vmatpush2.msra.mxu0 0.0
    %403 = vmatprep.subr.mxu0 0.0
    %404 = vmatpush2.msra.mxu0 0.0
    %405 = vmatprep.subr.mxu0 0.0
    %406 = vmatpush2.msra.mxu0 0.0
    %407 = vmatprep.subr.mxu0 0.0
    %408 = vmatpush2.msra.mxu0 0.0
    %409 = vmatprep.subr.mxu0 0.0
    %410 = vmatpush2.msra.mxu0 0.0
    %411 = vmatprep.subr.mxu0 0.0
    %412 = vmatpush2.msra.mxu0 0.0
    %413 = vmatprep.subr.mxu0 0.0
    %414 = vmatpush2.msra.mxu0 0.0
    %415 = vmatprep.subr.mxu0 0.0
    %416 = vmatpush2.msra.mxu0 0.0
    %417 = vmatprep.subr.mxu0 0.0
    %418 = vmatpush2.msra.mxu0 0.0
    %419 = vmatprep.subr.mxu0 0.0
    %420 = vmatpush2.msra.mxu0 0.0
    %421 = vmatprep.subr.mxu0 0.0
    %422 = vmatpush2.msra.mxu0 0.0
    %423 = vmatprep.subr.mxu0 0.0
    %424 = vmatpush2.msra.mxu0 0.0
    %425 = vmatprep.subr.mxu0 0.0
    %426 = vmatpush2.msra.mxu0 0.0
    %427 = vmatprep.subr.mxu0 0.0
    %428 = vmatpush2.msra.mxu0 0.0
    %429 = vmatprep.mubr.f32.mxu0 0.0
    %430 = vmatmul.mubr.f32.gmra.mxu0 %v341
    %v431 = vpop.f32.mrf.mxu0
    %v432 = vadd.f32 %v363, %v431
    %v433 = vpop.f32.mrf.mxu0
    %434 = vdwg.mxu0
    %v435 = vmin.f32 %v432, 0.0
    %v436 = vmul.f32 %v435, 1.442695
    %v437 = vpow.pop %v436
    %v438 = vsub.f32 %v437, 1.0
    %v439 = vmul.f32 %v438, 1.6732632
    %vm440 = vcmp.gt.f32.partialorder %v432, 0.0
    %v441 = vsel %vm440, %v432, %v439
    %v442 = vmul.f32 %v441, 1.050701
    %v443 = vadd.f32 %v442, %v341
    %v444 = vld [vmem:[#allocation10] sm:$0xff]
    %v445 = vld [vmem:[#allocation10 + $0x8] sm:$0xff]
    %v446 = vld [vmem:[#allocation10 + $0x10] sm:$0xff]
    %v447 = vld [vmem:[#allocation10 + $0x18] sm:$0xff]
    %v448 = vld [vmem:[#allocation10 + $0x20] sm:$0xff]
    %v449 = vld [vmem:[#allocation10 + $0x28] sm:$0xff]
    %v450 = vld [vmem:[#allocation10 + $0x30] sm:$0xff]
    %v451 = vld [vmem:[#allocation10 + $0x38] sm:$0xff]
    %v452 = vld [vmem:[#allocation10 + $0x40] sm:$0xff]
    %v453 = vld [vmem:[#allocation10 + $0x48] sm:$0xff]
    %v454 = vld [vmem:[#allocation10 + $0x50] sm:$0xff]
    %v455 = vld [vmem:[#allocation10 + $0x58] sm:$0xff]
    %v456 = vld [vmem:[#allocation10 + $0x60] sm:$0xff]
    %v457 = vld [vmem:[#allocation10 + $0x68] sm:$0xff]
    %v458 = vld [vmem:[#allocation10 + $0x70] sm:$0xff]
    %v459 = vld [vmem:[#allocation10 + $0x78] sm:$0xff]
    %v460 = vld [vmem:[%s8] sm:$0x1]
    %v462 = vlaneseq
    %v463 = vshrl.u32 %v462, 7
    %v464 = vsub.s32 0, %v463
    %v465 = vrot.slane %v460, %v464
    %467 = vmatprep.subr.mxu0 0.0
    %468 = vmatpush1.msra.mxu0 %v459
    %469 = vmatprep.subr.mxu0 0.0
    %470 = vmatpush1.msra.mxu0 %v458
    %471 = vmatprep.subr.mxu0 0.0
    %472 = vmatpush1.msra.mxu0 %v457
    %473 = vmatprep.subr.mxu0 0.0
    %474 = vmatpush1.msra.mxu0 %v456
    %475 = vmatprep.subr.mxu0 0.0
    %476 = vmatpush1.msra.mxu0 %v455
    %477 = vmatprep.subr.mxu0 0.0
    %478 = vmatpush1.msra.mxu0 %v454
    %479 = vmatprep.subr.mxu0 0.0
    %480 = vmatpush1.msra.mxu0 %v453
    %481 = vmatprep.subr.mxu0 0.0
    %482 = vmatpush1.msra.mxu0 %v452
    %483 = vmatprep.subr.mxu0 0.0
    %484 = vmatpush1.msra.mxu0 %v451
    %485 = vmatprep.subr.mxu0 0.0
    %486 = vmatpush1.msra.mxu0 %v450
    %487 = vmatprep.subr.mxu0 0.0
    %488 = vmatpush1.msra.mxu0 %v449
    %489 = vmatprep.subr.mxu0 0.0
    %490 = vmatpush1.msra.mxu0 %v448
    %491 = vmatprep.subr.mxu0 0.0
    %492 = vmatpush1.msra.mxu0 %v447
    %493 = vmatprep.subr.mxu0 0.0
    %494 = vmatpush1.msra.mxu0 %v446
    %495 = vmatprep.subr.mxu0 0.0
    %496 = vmatpush1.msra.mxu0 %v445
    %497 = vmatprep.subr.mxu0 0.0
    %498 = vmatpush1.msra.mxu0 %v444
    %499 = vmatprep.subr.mxu0 0.0
    %500 = vmatpush2.msra.mxu0 0.0
    %501 = vmatprep.subr.mxu0 0.0
    %502 = vmatpush2.msra.mxu0 0.0
    %503 = vmatprep.subr.mxu0 0.0
    %504 = vmatpush2.msra.mxu0 0.0
    %505 = vmatprep.subr.mxu0 0.0
    %506 = vmatpush2.msra.mxu0 0.0
    %507 = vmatprep.subr.mxu0 0.0
    %508 = vmatpush2.msra.mxu0 0.0
    %509 = vmatprep.subr.mxu0 0.0
    %510 = vmatpush2.msra.mxu0 0.0
    %511 = vmatprep.subr.mxu0 0.0
    %512 = vmatpush2.msra.mxu0 0.0
    %513 = vmatprep.subr.mxu0 0.0
    %514 = vmatpush2.msra.mxu0 0.0
    %515 = vmatprep.subr.mxu0 0.0
    %516 = vmatpush2.msra.mxu0 0.0
    %517 = vmatprep.subr.mxu0 0.0
    %518 = vmatpush2.msra.mxu0 0.0
    %519 = vmatprep.subr.mxu0 0.0
    %520 = vmatpush2.msra.mxu0 0.0
    %521 = vmatprep.subr.mxu0 0.0
    %522 = vmatpush2.msra.mxu0 0.0
    %523 = vmatprep.subr.mxu0 0.0
    %524 = vmatpush2.msra.mxu0 0.0
    %525 = vmatprep.subr.mxu0 0.0
    %526 = vmatpush2.msra.mxu0 0.0
    %527 = vmatprep.subr.mxu0 0.0
    %528 = vmatpush2.msra.mxu0 0.0
    %529 = vmatprep.subr.mxu0 0.0
    %530 = vmatpush2.msra.mxu0 0.0
    %531 = vmatprep.mubr.f32.mxu0 0.0
    %532 = vmatmul.mubr.f32.gmra.mxu0 %v443
    %v533 = vpop.f32.mrf.mxu0
    %v534 = vadd.f32 %v465, %v533
    %v535 = vpop.f32.mrf.mxu0
    %536 = vdwg.mxu0
    %v537 = vmin.f32 %v534, 0.0
    %v538 = vmul.f32 %v537, 1.442695
    %v539 = vpow.pop %v538
    %v540 = vsub.f32 %v539, 1.0
    %v541 = vmul.f32 %v540, 1.6732632
    %vm542 = vcmp.gt.f32.partialorder %v534, 0.0
    %v543 = vsel %vm542, %v534, %v541
    %v544 = vmul.f32 %v543, 1.050701
    %v545 = vadd.f32 %v544, %v443
    %v546 = vld [vmem:[#allocation11] sm:$0xff]
    %v547 = vld [vmem:[#allocation11 + $0x8] sm:$0xff]
    %v548 = vld [vmem:[#allocation11 + $0x10] sm:$0xff]
    %v549 = vld [vmem:[#allocation11 + $0x18] sm:$0xff]
    %v550 = vld [vmem:[#allocation11 + $0x20] sm:$0xff]
    %v551 = vld [vmem:[#allocation11 + $0x28] sm:$0xff]
    %v552 = vld [vmem:[#allocation11 + $0x30] sm:$0xff]
    %v553 = vld [vmem:[#allocation11 + $0x38] sm:$0xff]
    %v554 = vld [vmem:[#allocation11 + $0x40] sm:$0xff]
    %v555 = vld [vmem:[#allocation11 + $0x48] sm:$0xff]
    %v556 = vld [vmem:[#allocation11 + $0x50] sm:$0xff]
    %v557 = vld [vmem:[#allocation11 + $0x58] sm:$0xff]
    %v558 = vld [vmem:[#allocation11 + $0x60] sm:$0xff]
    %v559 = vld [vmem:[#allocation11 + $0x68] sm:$0xff]
    %v560 = vld [vmem:[#allocation11 + $0x70] sm:$0xff]
    %v561 = vld [vmem:[#allocation11 + $0x78] sm:$0xff]
    %v562 = vld [vmem:[%s10] sm:$0x1]
    %v564 = vlaneseq
    %v565 = vshrl.u32 %v564, 7
    %v566 = vsub.s32 0, %v565
    %v567 = vrot.slane %v562, %v566
    %569 = vmatprep.subr.mxu0 0.0
    %570 = vmatpush1.msra.mxu0 %v561
    %571 = vmatprep.subr.mxu0 0.0
    %572 = vmatpush1.msra.mxu0 %v560
    %573 = vmatprep.subr.mxu0 0.0
    %574 = vmatpush1.msra.mxu0 %v559
    %575 = vmatprep.subr.mxu0 0.0
    %576 = vmatpush1.msra.mxu0 %v558
    %577 = vmatprep.subr.mxu0 0.0
    %578 = vmatpush1.msra.mxu0 %v557
    %579 = vmatprep.subr.mxu0 0.0
    %580 = vmatpush1.msra.mxu0 %v556
    %581 = vmatprep.subr.mxu0 0.0
    %582 = vmatpush1.msra.mxu0 %v555
    %583 = vmatprep.subr.mxu0 0.0
    %584 = vmatpush1.msra.mxu0 %v554
    %585 = vmatprep.subr.mxu0 0.0
    %586 = vmatpush1.msra.mxu0 %v553
    %587 = vmatprep.subr.mxu0 0.0
    %588 = vmatpush1.msra.mxu0 %v552
    %589 = vmatprep.subr.mxu0 0.0
    %590 = vmatpush1.msra.mxu0 %v551
    %591 = vmatprep.subr.mxu0 0.0
    %592 = vmatpush1.msra.mxu0 %v550
    %593 = vmatprep.subr.mxu0 0.0
    %594 = vmatpush1.msra.mxu0 %v549
    %595 = vmatprep.subr.mxu0 0.0
    %596 = vmatpush1.msra.mxu0 %v548
    %597 = vmatprep.subr.mxu0 0.0
    %598 = vmatpush1.msra.mxu0 %v547
    %599 = vmatprep.subr.mxu0 0.0
    %600 = vmatpush1.msra.mxu0 %v546
    %601 = vmatprep.subr.mxu0 0.0
    %602 = vmatpush2.msra.mxu0 0.0
    %603 = vmatprep.subr.mxu0 0.0
    %604 = vmatpush2.msra.mxu0 0.0
    %605 = vmatprep.subr.mxu0 0.0
    %606 = vmatpush2.msra.mxu0 0.0
    %607 = vmatprep.subr.mxu0 0.0
    %608 = vmatpush2.msra.mxu0 0.0
    %609 = vmatprep.subr.mxu0 0.0
    %610 = vmatpush2.msra.mxu0 0.0
    %611 = vmatprep.subr.mxu0 0.0
    %612 = vmatpush2.msra.mxu0 0.0
    %613 = vmatprep.subr.mxu0 0.0
    %614 = vmatpush2.msra.mxu0 0.0
    %615 = vmatprep.subr.mxu0 0.0
    %616 = vmatpush2.msra.mxu0 0.0
    %617 = vmatprep.subr.mxu0 0.0
    %618 = vmatpush2.msra.mxu0 0.0
    %619 = vmatprep.subr.mxu0 0.0
    %620 = vmatpush2.msra.mxu0 0.0
    %621 = vmatprep.subr.mxu0 0.0
    %622 = vmatpush2.msra.mxu0 0.0
    %623 = vmatprep.subr.mxu0 0.0
    %624 = vmatpush2.msra.mxu0 0.0
    %625 = vmatprep.subr.mxu0 0.0
    %626 = vmatpush2.msra.mxu0 0.0
    %627 = vmatprep.subr.mxu0 0.0
    %628 = vmatpush2.msra.mxu0 0.0
    %629 = vmatprep.subr.mxu0 0.0
    %630 = vmatpush2.msra.mxu0 0.0
    %631 = vmatprep.subr.mxu0 0.0
    %632 = vmatpush2.msra.mxu0 0.0
    %633 = vmatprep.mubr.f32.mxu0 0.0
    %634 = vmatmul.mubr.f32.gmra.mxu0 %v545
    %v635 = vpop.f32.mrf.mxu0
    %v636 = vadd.f32 %v567, %v635
    %v637 = vpop.f32.mrf.mxu0
    %638 = vdwg.mxu0
    %v639 = vmin.f32 %v636, 0.0
    %v640 = vmul.f32 %v639, 1.442695
    %v641 = vpow.pop %v640
    %v642 = vsub.f32 %v641, 1.0
    %v643 = vmul.f32 %v642, 1.6732632
    %vm644 = vcmp.gt.f32.partialorder %v636, 0.0
    %v645 = vsel %vm644, %v636, %v643
    %v646 = vmul.f32 %v645, 1.050701
    %v647 = vadd.f32 %v646, %v545
    %v648 = vld [vmem:[#allocation13] sm:$0xff]
    %v649 = vld [vmem:[#allocation13 + $0x8] sm:$0xff]
    %v650 = vld [vmem:[#allocation13 + $0x10] sm:$0xff]
    %v651 = vld [vmem:[#allocation13 + $0x18] sm:$0xff]
    %v652 = vld [vmem:[#allocation13 + $0x20] sm:$0xff]
    %v653 = vld [vmem:[#allocation13 + $0x28] sm:$0xff]
    %v654 = vld [vmem:[#allocation13 + $0x30] sm:$0xff]
    %v655 = vld [vmem:[#allocation13 + $0x38] sm:$0xff]
    %v656 = vld [vmem:[#allocation13 + $0x40] sm:$0xff]
    %v657 = vld [vmem:[#allocation13 + $0x48] sm:$0xff]
    %v658 = vld [vmem:[#allocation13 + $0x50] sm:$0xff]
    %v659 = vld [vmem:[#allocation13 + $0x58] sm:$0xff]
    %v660 = vld [vmem:[#allocation13 + $0x60] sm:$0xff]
    %v661 = vld [vmem:[#allocation13 + $0x68] sm:$0xff]
    %v662 = vld [vmem:[#allocation13 + $0x70] sm:$0xff]
    %v663 = vld [vmem:[#allocation13 + $0x78] sm:$0xff]
    %v664 = vld [vmem:[%s12] sm:$0x1]
    %v666 = vlaneseq
    %v667 = vshrl.u32 %v666, 7
    %v668 = vsub.s32 0, %v667
    %v669 = vrot.slane %v664, %v668
    %671 = vmatprep.subr.mxu0 0.0
    %672 = vmatpush1.msra.mxu0 %v663
    %673 = vmatprep.subr.mxu0 0.0
    %674 = vmatpush1.msra.mxu0 %v662
    %675 = vmatprep.subr.mxu0 0.0
    %676 = vmatpush1.msra.mxu0 %v661
    %677 = vmatprep.subr.mxu0 0.0
    %678 = vmatpush1.msra.mxu0 %v660
    %679 = vmatprep.subr.mxu0 0.0
    %680 = vmatpush1.msra.mxu0 %v659
    %681 = vmatprep.subr.mxu0 0.0
    %682 = vmatpush1.msra.mxu0 %v658
    %683 = vmatprep.subr.mxu0 0.0
    %684 = vmatpush1.msra.mxu0 %v657
    %685 = vmatprep.subr.mxu0 0.0
    %686 = vmatpush1.msra.mxu0 %v656
    %687 = vmatprep.subr.mxu0 0.0
    %688 = vmatpush1.msra.mxu0 %v655
    %689 = vmatprep.subr.mxu0 0.0
    %690 = vmatpush1.msra.mxu0 %v654
    %691 = vmatprep.subr.mxu0 0.0
    %692 = vmatpush1.msra.mxu0 %v653
    %693 = vmatprep.subr.mxu0 0.0
    %694 = vmatpush1.msra.mxu0 %v652
    %695 = vmatprep.subr.mxu0 0.0
    %696 = vmatpush1.msra.mxu0 %v651
    %697 = vmatprep.subr.mxu0 0.0
    %698 = vmatpush1.msra.mxu0 %v650
    %699 = vmatprep.subr.mxu0 0.0
    %700 = vmatpush1.msra.mxu0 %v649
    %701 = vmatprep.subr.mxu0 0.0
    %702 = vmatpush1.msra.mxu0 %v648
    %703 = vmatprep.subr.mxu0 0.0
    %704 = vmatpush2.msra.mxu0 0.0
    %705 = vmatprep.subr.mxu0 0.0
    %706 = vmatpush2.msra.mxu0 0.0
    %707 = vmatprep.subr.mxu0 0.0
    %708 = vmatpush2.msra.mxu0 0.0
    %709 = vmatprep.subr.mxu0 0.0
    %710 = vmatpush2.msra.mxu0 0.0
    %711 = vmatprep.subr.mxu0 0.0
    %712 = vmatpush2.msra.mxu0 0.0
    %713 = vmatprep.subr.mxu0 0.0
    %714 = vmatpush2.msra.mxu0 0.0
    %715 = vmatprep.subr.mxu0 0.0
    %716 = vmatpush2.msra.mxu0 0.0
    %717 = vmatprep.subr.mxu0 0.0
    %718 = vmatpush2.msra.mxu0 0.0
    %719 = vmatprep.subr.mxu0 0.0
    %720 = vmatpush2.msra.mxu0 0.0
    %721 = vmatprep.subr.mxu0 0.0
    %722 = vmatpush2.msra.mxu0 0.0
    %723 = vmatprep.subr.mxu0 0.0
    %724 = vmatpush2.msra.mxu0 0.0
    %725 = vmatprep.subr.mxu0 0.0
    %726 = vmatpush2.msra.mxu0 0.0
    %727 = vmatprep.subr.mxu0 0.0
    %728 = vmatpush2.msra.mxu0 0.0
    %729 = vmatprep.subr.mxu0 0.0
    %730 = vmatpush2.msra.mxu0 0.0
    %731 = vmatprep.subr.mxu0 0.0
    %732 = vmatpush2.msra.mxu0 0.0
    %733 = vmatprep.subr.mxu0 0.0
    %734 = vmatpush2.msra.mxu0 0.0
    %735 = vmatprep.mubr.f32.mxu0 0.0
    %736 = vmatmul.mubr.f32.gmra.mxu0 %v647
    %v737 = vpop.f32.mrf.mxu0
    %v738 = vadd.f32 %v669, %v737
    %v739 = vpop.f32.mrf.mxu0
    %740 = vdwg.mxu0
    %741 = vst [vmem:[#allocation14] sm:$0xff] %v738
    // Predicated region
    $region82: #{tpu_custom_call.1} parent=1 // pred_check
      _
    $region83: #{tpu_custom_call.1} parent=1 // pred_check_branch
      %743 = sbr.rel (0) target = $region85
    $region84: #{tpu_custom_call.1} parent=1 // pred_region
      %s745 = ssub.s32 128, 128
      %746 = vsyncadd [#allocation4], %s745
      %s748 = sshll.u32 [#allocation14], 4
      %s749 = int_to_ptr.vmem [resolvable:$true] %s748
      %751 = dma.vmem_to_hbm [thread:$0]  %s749, 128, %s13, [#allocation4]
    $region85: #{tpu_custom_call.1} parent=1 // pred_fallthru
      _
    // Predicated region
    $region86: #{tpu_custom_call.1} parent=1 // pred_check
      _
    $region87: #{tpu_custom_call.1} parent=1 // pred_check_branch
      %753 = sbr.rel (0) target = $region89
    $region88: #{tpu_custom_call.1} parent=1 // pred_region
      %754 = dma.done [#allocation4], 128
    $region89: #{tpu_custom_call.1} parent=1 // pred_fallthru
      _
    %755 = vsyncpa [#allocation3], 1
    %756 = vsyncpa [#allocation6], 1
    %757 = vsyncpa [#allocation9], 1
    %758 = vsyncpa [#allocation12], 1
    %759 = vsyncpa [#allocation4], 1

</llo_original>
